<compile_context>
chip_gen: v5e
topology: v5e:2x2
jax: 0.10.0
libtpu: 0.0.40
codegen_flags: <defaults>
</compile_context>

<pallas_src>
import functools
import math
from typing import NamedTuple

import jax
import jax.numpy as jnp
from jax import lax
from jax.experimental import pallas as pl
from jax.experimental.pallas import tpu as pltpu


class Config(NamedTuple):
    dim: int
    n_layers: int
    n_heads: int
    n_kv_heads: int
    head_dim: int
    vocab_size: int
    norm_eps: float
    max_batch_size: int
    max_seq_len: int
    ffn_hidden: int


# Leave headroom under v7x's 64 MiB physical VMEM (v5e/v6e have 128 MiB).
_MM_VMEM_LIMIT = 48 * 1024 * 1024


# ----------------------------- tiling helper --------------------------------

def _pick_tile(dim, pref, align):
    """Tile size that is either the full dim or an `align`-multiple dividing dim."""
    if dim <= pref:
        return dim
    t = (pref // align) * align
    while t >= align:
        if dim % t == 0:
            return t
        t -= align
    return dim  # fall back to full dimension


# ----------------------------- tiled matmul ----------------------------------

def _matmul_kernel(x_ref, w_ref, o_ref, acc_ref):
    @pl.when(pl.program_id(2) == 0)
    def _():
        acc_ref[...] = jnp.zeros_like(acc_ref)

    acc_ref[...] += jnp.dot(x_ref[...], w_ref[...],
                            preferred_element_type=jnp.float32)

    @pl.when(pl.program_id(2) == pl.num_programs(2) - 1)
    def _():
        o_ref[...] = acc_ref[...].astype(o_ref.dtype)


def _matmul_res_kernel(x_ref, w_ref, r_ref, o_ref, acc_ref):
    """Matmul with the residual add fused into the epilogue (o = x@w + r)."""
    @pl.when(pl.program_id(2) == 0)
    def _():
        acc_ref[...] = jnp.zeros_like(acc_ref)

    acc_ref[...] += jnp.dot(x_ref[...], w_ref[...],
                            preferred_element_type=jnp.float32)

    @pl.when(pl.program_id(2) == pl.num_programs(2) - 1)
    def _():
        o_ref[...] = (acc_ref[...] + r_ref[...].astype(jnp.float32)).astype(o_ref.dtype)


def pallas_linear(x, w, residual=None, out_dtype=None):
    """y = x @ w (+ residual).  x:(M,K) w:(K,N) -> (M,N), f32 MXU accumulation."""
    M, K = x.shape
    K2, N = w.shape
    assert K == K2
    out_dtype = out_dtype or x.dtype
    tm = _pick_tile(M, 512, 16)      # bf16 sublane packing -> 16-row alignment
    tn = _pick_tile(N, 512, 128)
    tk = _pick_tile(K, 1024, 128)
    grid = (M // tm, N // tn, K // tk)

    in_specs = [
        pl.BlockSpec((tm, tk), lambda i, j, k: (i, k)),
        pl.BlockSpec((tk, tn), lambda i, j, k: (k, j)),
    ]
    operands = [x, w]
    kernel = _matmul_kernel
    if residual is not None:
        assert residual.shape == (M, N)
        in_specs.append(pl.BlockSpec((tm, tn), lambda i, j, k: (i, j)))
        operands.append(residual)
        kernel = _matmul_res_kernel

    return pl.pallas_call(
        kernel,
        out_shape=jax.ShapeDtypeStruct((M, N), out_dtype),
        grid=grid,
        in_specs=in_specs,
        out_specs=pl.BlockSpec((tm, tn), lambda i, j, k: (i, j)),
        scratch_shapes=[pltpu.VMEM((tm, tn), jnp.float32)],
        compiler_params=pltpu.CompilerParams(
            dimension_semantics=("parallel", "parallel", "arbitrary"),
            vmem_limit_bytes=_MM_VMEM_LIMIT),
    )(*operands)


# ------------------------ fused w1|w3 + SwiGLU gate ---------------------------

def _ffn_gate_kernel(x_ref, w1_ref, w3_ref, o_ref, acc1_ref, acc3_ref):
    @pl.when(pl.program_id(2) == 0)
    def _():
        acc1_ref[...] = jnp.zeros_like(acc1_ref)
        acc3_ref[...] = jnp.zeros_like(acc3_ref)

    x = x_ref[...]  # read the activation tile once, feed both matmuls
    acc1_ref[...] += jnp.dot(x, w1_ref[...], preferred_element_type=jnp.float32)
    acc3_ref[...] += jnp.dot(x, w3_ref[...], preferred_element_type=jnp.float32)

    @pl.when(pl.program_id(2) == pl.num_programs(2) - 1)
    def _():
        a = acc1_ref[...]
        o_ref[...] = (a * jax.nn.sigmoid(a) * acc3_ref[...]).astype(o_ref.dtype)


def pallas_ffn_gate(x, w1, w3):
    """silu(x @ w1) * (x @ w3) fused into one tiled kernel."""
    M, K = x.shape
    _, N = w1.shape
    tm = _pick_tile(M, 512, 16)
    tn = _pick_tile(N, 512, 128)
    tk = _pick_tile(K, 1024, 128)
    grid = (M // tm, N // tn, K // tk)
    # VMEM budget per step ~9-10 MiB (2 weight streams double-buffered + 2 f32
    # accumulators) -- safely inside the 48 MiB limit on all generations.
    return pl.pallas_call(
        _ffn_gate_kernel,
        out_shape=jax.ShapeDtypeStruct((M, N), x.dtype),
        grid=grid,
        in_specs=[
            pl.BlockSpec((tm, tk), lambda i, j, k: (i, k)),
            pl.BlockSpec((tk, tn), lambda i, j, k: (k, j)),
            pl.BlockSpec((tk, tn), lambda i, j, k: (k, j)),
        ],
        out_specs=pl.BlockSpec((tm, tn), lambda i, j, k: (i, j)),
        scratch_shapes=[pltpu.VMEM((tm, tn), jnp.float32),
                        pltpu.VMEM((tm, tn), jnp.float32)],
        compiler_params=pltpu.CompilerParams(
            dimension_semantics=("parallel", "parallel", "arbitrary"),
            vmem_limit_bytes=_MM_VMEM_LIMIT),
    )(x, w1, w3)


# ----------------------------- RMSNorm ---------------------------------------

def _rmsnorm_kernel(x_ref, w_ref, o_ref, *, eps):
    x = x_ref[...].astype(jnp.float32)
    ms = jnp.mean(x * x, axis=-1, keepdims=True)
    y = x * lax.rsqrt(ms + eps)
    o_ref[...] = (y * w_ref[...].astype(jnp.float32)).astype(o_ref.dtype)


def pallas_rmsnorm(x, w, eps):
    """Row-tiled RMSNorm over last dim.  x:(M,D), w:(D,)."""
    M, D = x.shape
    tm = _pick_tile(M, 512, 8)
    w2 = w.reshape(1, D)
    return pl.pallas_call(
        functools.partial(_rmsnorm_kernel, eps=eps),
        out_shape=jax.ShapeDtypeStruct((M, D), x.dtype),
        grid=(M // tm,),
        in_specs=[
            pl.BlockSpec((tm, D), lambda i: (i, 0)),
            pl.BlockSpec((1, D), lambda i: (0, 0)),
        ],
        out_specs=pl.BlockSpec((tm, D), lambda i: (i, 0)),
        compiler_params=pltpu.CompilerParams(dimension_semantics=("parallel",)),
    )(x, w2)


# --------------------- flash attention (online softmax, GQA) -----------------

def _attention_kernel(q_ref, k_ref, v_ref, o_ref, m_sc, l_sc, acc_sc,
                      *, scale, start_pos, n_rep, tq, tkv, hd):
    qi = pl.program_id(2)
    ki = pl.program_id(3)

    @pl.when(ki == 0)
    def _():
        m_sc[...] = jnp.full_like(m_sc, -jnp.inf)
        l_sc[...] = jnp.zeros_like(l_sc)
        acc_sc[...] = jnp.zeros_like(acc_sc)

    R = n_rep * tq
    first_q = qi * tq + start_pos          # global position of the first query row
    blk_start = ki * tkv

    # Skip KV tiles entirely in the causal future of every query row in the block.
    # ki == 0 is never skipped (key position 0 is visible to every query), so the
    # running max is always updated with a finite value before it is ever used.
    needed = blk_start <= first_q + (tq - 1)

    @pl.when(needed)
    def _():
        k = k_ref[0, 0]                                  # (tkv, hd)
        v = v_ref[0, 0]                                  # (tkv, hd)
        # fold 1/sqrt(hd) into q (small) rather than scaling the (R,tkv) scores.
        q = (q_ref[0, 0].astype(jnp.float32) * scale).astype(k.dtype).reshape(R, hd)

        # scores (R, tkv): contract last dims directly, no materialized K transpose.
        s = lax.dot_general(q, k, (((1,), (1,)), ((), ())),
                            preferred_element_type=jnp.float32)

        def update(scores):
            m_prev = m_sc[...]
            m_new = jnp.maximum(m_prev, scores.max(axis=-1, keepdims=True))
            alpha = jnp.exp(m_prev - m_new)
            p = jnp.exp(scores - m_new)
            l_sc[...] = alpha * l_sc[...] + p.sum(axis=-1, keepdims=True)
            acc_sc[...] = alpha * acc_sc[...] + lax.dot_general(
                p.astype(v.dtype), v, (((1,), (0,)), ((), ())),
                preferred_element_type=jnp.float32)
            m_sc[...] = m_new

        # Fully-visible tiles (strictly below the causal diagonal, and therefore
        # also fully inside the valid cache range) take a mask-free fast path.
        fully_visible = blk_start + (tkv - 1) <= first_q

        @pl.when(fully_visible)
        def _():
            update(s)

        @pl.when(jnp.logical_not(fully_visible))
        def _():
            # rows are rep-major: r = rep*tq + qpos  ->  local qpos = r % tq.
            qpos = first_q + (lax.broadcasted_iota(jnp.int32, (R, 1), 0) % tq)
            kpos = blk_start + lax.broadcasted_iota(jnp.int32, (1, tkv), 1)
            update(jnp.where(kpos <= qpos, s, -1e30))

    @pl.when(ki == pl.num_programs(3) - 1)
    def _():
        inv_l = pl.reciprocal(l_sc[...], approx=False)
        out = (acc_sc[...] * inv_l).astype(o_ref.dtype)     # (R, hd), rep-major rows
        # write directly in (tq, n_rep, hd) layout so the HBM output is already
        # (B, S, KV, n_rep, hd) and the flatten before wo is layout-free.
        for rep in range(n_rep):
            o_ref[0, :, 0, rep, :] = out[rep * tq:(rep + 1) * tq, :]


def pallas_attention(qg, cache_k, cache_v, *, T, scale, start_pos):
    """qg:(B, KV, n_rep, S, hd)   cache_k/v:(Bmax, KV, Tmax, hd) -> (B, S, KV, n_rep, hd).

    The caches are read in place via the BlockSpec index_maps (no XLA transpose or
    slice copies); key positions >= T are masked out by the causal mask.
    """
    B, KV, n_rep, S, hd = qg.shape
    Bmax, KV2, Tmax, hd2 = cache_k.shape
    assert KV == KV2 and hd == hd2

    # cap R = n_rep * tq at ~256 rows so the (R, tkv) score block stays in vregs.
    tq = _pick_tile(S, max(16, 256 // max(n_rep, 1)), 8)
    tkv = _pick_tile(Tmax, 512, 128)
    grid = (B, KV, S // tq, pl.cdiv(T, tkv))

    kernel = functools.partial(_attention_kernel, scale=scale, start_pos=start_pos,
                               n_rep=n_rep, tq=tq, tkv=tkv, hd=hd)
    return pl.pallas_call(
        kernel,
        out_shape=jax.ShapeDtypeStruct((B, S, KV, n_rep, hd), qg.dtype),
        grid=grid,
        in_specs=[
            pl.BlockSpec((1, 1, n_rep, tq, hd), lambda b, g, qi, ki: (b, g, 0, qi, 0)),
            pl.BlockSpec((1, 1, tkv, hd), lambda b, g, qi, ki: (b, g, ki, 0)),
            pl.BlockSpec((1, 1, tkv, hd), lambda b, g, qi, ki: (b, g, ki, 0)),
        ],
        out_specs=pl.BlockSpec((1, tq, 1, n_rep, hd),
                               lambda b, g, qi, ki: (b, qi, g, 0, 0)),
        scratch_shapes=[
            pltpu.VMEM((n_rep * tq, 1), jnp.float32),    # m
            pltpu.VMEM((n_rep * tq, 1), jnp.float32),    # l
            pltpu.VMEM((n_rep * tq, hd), jnp.float32),   # acc
        ],
        compiler_params=pltpu.CompilerParams(
            dimension_semantics=("parallel", "parallel", "parallel", "arbitrary")),
    )(qg, cache_k, cache_v)


# ----------------------------- JAX glue (RoPE, cache, wiring) -----------------

def precompute_freqs_cis(dim, end, theta):
    freqs = 1.0 / theta ** (jnp.arange(0, dim, 2)[: dim // 2].astype(jnp.float32) / dim)
    t = jnp.arange(end, dtype=jnp.float32)
    freqs = jnp.outer(t, freqs)                      # (end, dim//2)
    return jnp.cos(freqs), jnp.sin(freqs)


def apply_rotary_emb(xq, xk, cos, sin):
    # xq:(B,S,H,D)  cos,sin:(S,D//2); interleaved rotation in f32, cast back.
    # TODO(synk): fold into a Pallas kernel / QKV epilogue; under jit this fuses
    # into a single elementwise pass here.
    def rot(x):
        dt = x.dtype
        xf = x.astype(jnp.float32)
        xr = xf.reshape(*x.shape[:-1], -1, 2)
        xre, xim = xr[..., 0], xr[..., 1]
        c = cos[None, :, None, :]
        s = sin[None, :, None, :]
        ore = xre * c - xim * s
        oim = xre * s + xim * c
        return jnp.stack([ore, oim], axis=-1).reshape(x.shape).astype(dt)
    return rot(xq), rot(xk)


def attention_forward(lp, xn, residual2, start_pos, cos, sin, cfg, cache_k, cache_v):
    B, S, dim = xn.shape
    H, KV, hd = cfg.n_heads, cfg.n_kv_heads, cfg.head_dim
    n_rep = H // KV
    x2 = xn.reshape(B * S, dim)

    # fused QKV projection (x read from HBM once).
    # TODO(synk): produce q/k/v as three pallas outputs to avoid the XLA slices.
    qkv = pallas_linear(x2, lp["wqkv"])
    q_sz, kv_sz = H * hd, KV * hd
    xq = qkv[:, :q_sz].reshape(B, S, H, hd)
    xk = qkv[:, q_sz:q_sz + kv_sz].reshape(B, S, KV, hd)
    xv = qkv[:, q_sz + kv_sz:].reshape(B, S, KV, hd)
    xq, xk = apply_rotary_emb(xq, xk, cos, sin)

    # KV cache layout (Bmax, KV, Tmax, hd): only the S new tokens are permuted
    # (small); the cache itself is updated in place (donated buffers under jit)
    # and is never transposed or copied.
    # TODO(synk): replace with a Pallas scatter using input_output_aliases.
    xk_t = jnp.swapaxes(xk, 1, 2).astype(cache_k.dtype)   # (B, KV, S, hd)
    xv_t = jnp.swapaxes(xv, 1, 2).astype(cache_v.dtype)
    cache_k = lax.dynamic_update_slice(cache_k, xk_t, (0, 0, start_pos, 0))
    cache_v = lax.dynamic_update_slice(cache_v, xv_t, (0, 0, start_pos, 0))

    # group query heads by their shared KV head: (B, KV, n_rep, S, hd).
    qg = xq.reshape(B, S, KV, n_rep, hd).transpose(0, 2, 3, 1, 4)
    T = start_pos + S
    out = pallas_attention(qg, cache_k, cache_v, T=T,
                           scale=1.0 / math.sqrt(hd), start_pos=start_pos)
    out2 = out.reshape(B * S, H * hd)     # (B,S,KV,n_rep,hd) -> layout-free flatten

    # wo projection with the residual add fused into the epilogue.
    h2 = pallas_linear(out2, lp["wo"], residual=residual2)
    return h2, cache_k, cache_v


def feed_forward(lp, x2, residual2):
    g = pallas_ffn_gate(x2, lp["w1"], lp["w3"])             # silu(x@w1)*(x@w3) fused
    return pallas_linear(g, lp["w2"], residual=residual2)   # w2 matmul + residual add


def block_forward(lp, x, start_pos, cos, sin, cfg, cache_k, cache_v):
    B, S, dim = x.shape
    eps = cfg.norm_eps
    x2 = x.reshape(B * S, dim)
    xn = pallas_rmsnorm(x2, lp["attention_norm"], eps).reshape(B, S, dim)
    h2, cache_k, cache_v = attention_forward(lp, xn, x2, start_pos, cos, sin, cfg,
                                             cache_k, cache_v)   # h2 = x + attn
    hn = pallas_rmsnorm(h2, lp["ffn_norm"], eps)
    out2 = feed_forward(lp, hn, h2)                               # out = h + ffn
    return out2.reshape(B, S, dim), cache_k, cache_v


@functools.partial(jax.jit, static_argnums=(5, 6), donate_argnums=(2,))
def transformer_forward(params, tokens, caches, freqs_cos, freqs_sin, start_pos, cfg):
    B, S = tokens.shape
    dim = cfg.dim
    h = jnp.take(params["tok_embeddings"], tokens, axis=0)          # (B,S,dim) bf16
    cos = freqs_cos[start_pos:start_pos + S]
    sin = freqs_sin[start_pos:start_pos + S]
    new_caches = []
    for lp, (ck, cv) in zip(params["layers"], caches):
        h, ck, cv = block_forward(lp, h, start_pos, cos, sin, cfg, ck, cv)
        new_caches.append((ck, cv))
    hn = pallas_rmsnorm(h.reshape(B * S, dim), params["norm"], cfg.norm_eps)
    logits = pallas_linear(hn, params["output"], out_dtype=jnp.float32).reshape(B, S, -1)
    return logits, new_caches


# ----------------------------- parameter / cache init -------------------------

def init_params(key, cfg, dtype=jnp.bfloat16):
    dim, H, KV, hd = cfg.dim, cfg.n_heads, cfg.n_kv_heads, cfg.head_dim
    hidden = cfg.ffn_hidden
    vocab = cfg.vocab_size

    def dense(k, fan_in, fan_out):
        w = jax.random.normal(k, (fan_in, fan_out), jnp.float32) / math.sqrt(fan_in)
        return w.astype(dtype)

    keys = iter(jax.random.split(key, 4 + 8 * cfg.n_layers))
    params = {
        "tok_embeddings": (0.02 * jax.random.normal(next(keys), (vocab, dim),
                                                    jnp.float32)).astype(dtype),
        "norm": jnp.ones((dim,), jnp.float32),
        "output": dense(next(keys), dim, vocab),
        "layers": [],
    }
    for _ in range(cfg.n_layers):
        wq = dense(next(keys), dim, H * hd)
        wk = dense(next(keys), dim, KV * hd)
        wv = dense(next(keys), dim, KV * hd)
        params["layers"].append({
            "wqkv": jnp.concatenate([wq, wk, wv], axis=1),      # fused QKV weight
            "wo": dense(next(keys), H * hd, dim),
            "w1": dense(next(keys), dim, hidden),
            "w2": dense(next(keys), hidden, dim),
            "w3": dense(next(keys), dim, hidden),
            "attention_norm": jnp.ones((dim,), jnp.float32),
            "ffn_norm": jnp.ones((dim,), jnp.float32),
        })
    return params


def init_caches(cfg, dtype=jnp.bfloat16):
    # (Bmax, n_kv_heads, Tmax, head_dim): read by the attention kernel in place.
    shape = (cfg.max_batch_size, cfg.n_kv_heads, cfg.max_seq_len, cfg.head_dim)
    return [(jnp.zeros(shape, dtype), jnp.zeros(shape, dtype))
            for _ in range(cfg.n_layers)]


# ----------------------------- main -------------------------------------------

if __name__ == "__main__":
    dim = 64
    n_heads = 4
    n_kv_heads = 2
    head_dim = dim // n_heads
    multiple_of = 32
    ffn_hidden = int(2 * (4 * dim) / 3)
    ffn_hidden = multiple_of * ((ffn_hidden + multiple_of - 1) // multiple_of)

    cfg = Config(dim=dim, n_layers=2, n_heads=n_heads, n_kv_heads=n_kv_heads,
                 head_dim=head_dim, vocab_size=96, norm_eps=1e-5,
                 max_batch_size=4, max_seq_len=16, ffn_hidden=ffn_hidden)

    freqs_cos, freqs_sin = precompute_freqs_cis(head_dim, cfg.max_seq_len * 2, 500000.0)

    root = jax.random.PRNGKey(0)
    pkey, tkey = jax.random.split(root)
    params = init_params(pkey, cfg)
    caches = init_caches(cfg)

    batch, seqlen, start_pos = 2, 8, 0
    tokens = jax.random.randint(tkey, (batch, seqlen), 0, cfg.vocab_size, dtype=jnp.int32)

    logits, caches = transformer_forward(params, tokens, caches,
                                         freqs_cos, freqs_sin, start_pos, cfg)
    logits = jax.block_until_ready(logits)
    assert logits.shape == (batch, seqlen, cfg.vocab_size)
    assert logits.dtype == jnp.float32
    assert bool(jnp.all(jnp.isfinite(logits)))
    print("KERNEL_OK")
</pallas_src>

<mosaic_0001>
module attributes {stable_mosaic.version = 11 : i64} {
  func.func @_matmul_kernel(%arg0: i32, %arg1: i32, %arg2: i32, %arg3: memref<16x64xbf16, #tpu.memory_space<vmem>>, %arg4: memref<64x128xbf16, #tpu.memory_space<vmem>>, %arg5: memref<16x128xbf16, #tpu.memory_space<vmem>>, %arg6: memref<16x128xf32, #tpu.memory_space<vmem>>) attributes {dimension_semantics = [#tpu.dimension_semantics<parallel>, #tpu.dimension_semantics<parallel>, #tpu.dimension_semantics<arbitrary>], iteration_bounds = array<i64: 1, 1, 1>, scalar_prefetch = 0 : i64, scratch_operands = 1 : i64, tpu.core_type = #tpu.core_type<tc>, window_params = [{transform_indices = @transform_0, window_bounds = array<i64: 16, 64>}, {transform_indices = @transform_1, window_bounds = array<i64: 64, 128>}, {transform_indices = @transform_2, window_bounds = array<i64: 16, 128>}]} {
    %c0_i32 = arith.constant 0 : i32
    %0 = arith.cmpi eq, %arg2, %c0_i32 : i32
    %1 = arith.extui %0 : i1 to i32
    %c0_i32_0 = arith.constant 0 : i32
    %2 = arith.cmpi ne, %1, %c0_i32_0 : i32
    scf.if %2 {
      %cst_10 = arith.constant 0.000000e+00 : f32
      %12 = vector.broadcast %cst_10 : f32 to vector<16x128xf32>
      %c0_11 = arith.constant 0 : index
      %c0_12 = arith.constant 0 : index
      %13 = vector.load %arg6[%c0_11, %c0_12] : memref<16x128xf32, #tpu.memory_space<vmem>>, vector<16x128xf32>
      tpu.vector_store %arg6[%c0_11, %c0_12], %12 {strides = array<i32>} : memref<16x128xf32, #tpu.memory_space<vmem>>, vector<16x128xf32>,
    } else {
    }
    %c0 = arith.constant 0 : index
    %c0_1 = arith.constant 0 : index
    %3 = vector.load %arg6[%c0, %c0_1] : memref<16x128xf32, #tpu.memory_space<vmem>>, vector<16x128xf32>
    %c0_2 = arith.constant 0 : index
    %c0_3 = arith.constant 0 : index
    %4 = vector.load %arg3[%c0_2, %c0_3] : memref<16x64xbf16, #tpu.memory_space<vmem>>, vector<16x64xbf16>
    %c0_4 = arith.constant 0 : index
    %c0_5 = arith.constant 0 : index
    %5 = vector.load %arg4[%c0_4, %c0_5] : memref<64x128xbf16, #tpu.memory_space<vmem>>, vector<64x128xbf16>
    %cst = arith.constant dense<0.000000e+00> : vector<16x128xf32>
    %6 = tpu.matmul %4, %5, %cst {dimension_numbers = #tpu.dot_dimension_numbers<[1], [0], [0], [1], [0, 0, 1, 1], [], []>} : vector<16x64xbf16>, vector<64x128xbf16>, vector<16x128xf32> -> vector<16x128xf32>
    %7 = arith.addf %3, %6 : vector<16x128xf32>
    %c0_6 = arith.constant 0 : index
    %c0_7 = arith.constant 0 : index
    %8 = vector.load %arg6[%c0_6, %c0_7] : memref<16x128xf32, #tpu.memory_space<vmem>>, vector<16x128xf32>
    tpu.vector_store %arg6[%c0_6, %c0_7], %7 {strides = array<i32>} : memref<16x128xf32, #tpu.memory_space<vmem>>, vector<16x128xf32>,
    %c0_i32_8 = arith.constant 0 : i32
    %9 = arith.cmpi eq, %arg2, %c0_i32_8 : i32
    %10 = arith.extui %9 : i1 to i32
    %c0_i32_9 = arith.constant 0 : i32
    %11 = arith.cmpi ne, %10, %c0_i32_9 : i32
    scf.if %11 {
      %c0_10 = arith.constant 0 : index
      %c0_11 = arith.constant 0 : index
      %12 = vector.load %arg6[%c0_10, %c0_11] : memref<16x128xf32, #tpu.memory_space<vmem>>, vector<16x128xf32>
      %13 = arith.truncf %12 : vector<16x128xf32> to vector<16x128xbf16>
      %c0_12 = arith.constant 0 : index
      %c0_13 = arith.constant 0 : index
      %14 = vector.load %arg5[%c0_12, %c0_13] : memref<16x128xbf16, #tpu.memory_space<vmem>>, vector<16x128xbf16>
      tpu.vector_store %arg5[%c0_12, %c0_13], %13 {strides = array<i32>} : memref<16x128xbf16, #tpu.memory_space<vmem>>, vector<16x128xbf16>,
    } else {
    }
    return
  }
  func.func @transform_0(%arg0: i32, %arg1: i32, %arg2: i32) -> (i32, i32) {
    %c0_i32 = arith.constant 0 : i32
    return %arg0, %arg2 : i32, i32
  }
  func.func @transform_1(%arg0: i32, %arg1: i32, %arg2: i32) -> (i32, i32) {
    %c0_i32 = arith.constant 0 : i32
    return %arg2, %arg1 : i32, i32
  }
  func.func @transform_2(%arg0: i32, %arg1: i32, %arg2: i32) -> (i32, i32) {
    %c0_i32 = arith.constant 0 : i32
    return %arg0, %arg1 : i32, i32
  }
}

module attributes {stable_mosaic.version = 11 : i64} {
  func.func @_rmsnorm_kernel(%arg0: i32, %arg1: memref<16x64xbf16, #tpu.memory_space<vmem>>, %arg2: memref<1x64xf32, #tpu.memory_space<vmem>>, %arg3: memref<16x64xbf16, #tpu.memory_space<vmem>>) attributes {dimension_semantics = [#tpu.dimension_semantics<parallel>], iteration_bounds = array<i64: 1>, scalar_prefetch = 0 : i64, scratch_operands = 0 : i64, tpu.core_type = #tpu.core_type<tc>, window_params = [{transform_indices = @transform_0, window_bounds = array<i64: 16, 64>}, {pipeline_mode = #tpu.pipeline_mode<synchronous>, transform_indices = @transform_1, window_bounds = array<i64: 1, 64>}, {transform_indices = @transform_2, window_bounds = array<i64: 16, 64>}]} {
    %c0 = arith.constant 0 : index
    %c0_0 = arith.constant 0 : index
    %0 = vector.load %arg1[%c0, %c0_0] : memref<16x64xbf16, #tpu.memory_space<vmem>>, vector<16x64xbf16>
    %1 = arith.extf %0 : vector<16x64xbf16> to vector<16x64xf32>
    %2 = arith.mulf %1, %1 : vector<16x64xf32>
    %cst = arith.constant dense<0.000000e+00> : vector<16xf32>
    %3 = vector.multi_reduction <add>, %2, %cst [1] : vector<16x64xf32> to vector<16xf32>
    %4 = vector.shape_cast %3 : vector<16xf32> to vector<16x1xf32>
    %cst_1 = arith.constant 6.400000e+01 : f32
    %5 = vector.broadcast %cst_1 : f32 to vector<16x1xf32>
    %6 = arith.divf %4, %5 : vector<16x1xf32>
    %cst_2 = arith.constant 9.99999974E-6 : f32
    %7 = vector.broadcast %cst_2 : f32 to vector<16x1xf32>
    %8 = arith.addf %6, %7 : vector<16x1xf32>
    %9 = math.rsqrt %8 : vector<16x1xf32>
    %10 = vector.broadcast %9 : vector<16x1xf32> to vector<16x64xf32>
    %11 = arith.mulf %1, %10 : vector<16x64xf32>
    %c0_3 = arith.constant 0 : index
    %c0_4 = arith.constant 0 : index
    %12 = vector.load %arg2[%c0_3, %c0_4] : memref<1x64xf32, #tpu.memory_space<vmem>>, vector<1x64xf32>
    %13 = vector.broadcast %12 : vector<1x64xf32> to vector<16x64xf32>
    %14 = arith.mulf %11, %13 : vector<16x64xf32>
    %15 = arith.truncf %14 : vector<16x64xf32> to vector<16x64xbf16>
    %c0_5 = arith.constant 0 : index
    %c0_6 = arith.constant 0 : index
    %16 = vector.load %arg3[%c0_5, %c0_6] : memref<16x64xbf16, #tpu.memory_space<vmem>>, vector<16x64xbf16>
    tpu.vector_store %arg3[%c0_5, %c0_6], %15 {strides = array<i32>} : memref<16x64xbf16, #tpu.memory_space<vmem>>, vector<16x64xbf16>,
    return
  }
  func.func @transform_0(%arg0: i32) -> (i32, i32) {
    %c0_i32 = arith.constant 0 : i32
    %c0_i32_0 = arith.constant 0 : i32
    return %arg0, %c0_i32 : i32, i32
  }
  func.func @transform_1(%arg0: i32) -> (i32, i32) {
    %c0_i32 = arith.constant 0 : i32
    %c0_i32_0 = arith.constant 0 : i32
    %c0_i32_1 = arith.constant 0 : i32
    return %c0_i32, %c0_i32_0 : i32, i32
  }
  func.func @transform_2(%arg0: i32) -> (i32, i32) {
    %c0_i32 = arith.constant 0 : i32
    %c0_i32_0 = arith.constant 0 : i32
    return %arg0, %c0_i32 : i32, i32
  }
}

module attributes {stable_mosaic.version = 11 : i64} {
  func.func @_attention_kernel(%arg0: i32, %arg1: i32, %arg2: i32, %arg3: i32, %arg4: memref<1x1x2x8x16xbf16, #tpu.memory_space<vmem>>, %arg5: memref<1x1x16x16xbf16, #tpu.memory_space<vmem>>, %arg6: memref<1x1x16x16xbf16, #tpu.memory_space<vmem>>, %arg7: memref<1x8x1x2x16xbf16, #tpu.memory_space<vmem>>, %arg8: memref<16x1xf32, #tpu.memory_space<vmem>>, %arg9: memref<16x1xf32, #tpu.memory_space<vmem>>, %arg10: memref<16x16xf32, #tpu.memory_space<vmem>>) attributes {dimension_semantics = [#tpu.dimension_semantics<parallel>, #tpu.dimension_semantics<parallel>, #tpu.dimension_semantics<parallel>, #tpu.dimension_semantics<arbitrary>], iteration_bounds = array<i64: 2, 2, 1, 1>, scalar_prefetch = 0 : i64, scratch_operands = 3 : i64, tpu.core_type = #tpu.core_type<tc>, window_params = [{transform_indices = @transform_0, window_bounds = array<i64: 1, 1, 2, 8, 16>}, {transform_indices = @transform_1, window_bounds = array<i64: 1, 1, 16, 16>}, {transform_indices = @transform_2, window_bounds = array<i64: 1, 1, 16, 16>}, {transform_indices = @transform_3, window_bounds = array<i64: 1, 8, 1, 2, 16>}]} {
    %c0_i32 = arith.constant 0 : i32
    %0 = arith.cmpi eq, %arg3, %c0_i32 : i32
    %1 = arith.extui %0 : i1 to i32
    %c0_i32_0 = arith.constant 0 : i32
    %2 = arith.cmpi ne, %1, %c0_i32_0 : i32
    scf.if %2 {
      %cst = arith.constant 0xFF800000 : f32
      %13 = vector.broadcast %cst : f32 to vector<16x1xf32>
      %c0 = arith.constant 0 : index
      %c0_5 = arith.constant 0 : index
      %14 = vector.load %arg8[%c0, %c0_5] : memref<16x1xf32, #tpu.memory_space<vmem>>, vector<16x1xf32>
      tpu.vector_store %arg8[%c0, %c0_5], %13 {strides = array<i32>} : memref<16x1xf32, #tpu.memory_space<vmem>>, vector<16x1xf32>,
      %cst_6 = arith.constant 0.000000e+00 : f32
      %15 = vector.broadcast %cst_6 : f32 to vector<16x1xf32>
      %c0_7 = arith.constant 0 : index
      %c0_8 = arith.constant 0 : index
      %16 = vector.load %arg9[%c0_7, %c0_8] : memref<16x1xf32, #tpu.memory_space<vmem>>, vector<16x1xf32>
      tpu.vector_store %arg9[%c0_7, %c0_8], %15 {strides = array<i32>} : memref<16x1xf32, #tpu.memory_space<vmem>>, vector<16x1xf32>,
      %cst_9 = arith.constant 0.000000e+00 : f32
      %17 = vector.broadcast %cst_9 : f32 to vector<16x16xf32>
      %c0_10 = arith.constant 0 : index
      %c0_11 = arith.constant 0 : index
      %18 = vector.load %arg10[%c0_10, %c0_11] : memref<16x16xf32, #tpu.memory_space<vmem>>, vector<16x16xf32>
      tpu.vector_store %arg10[%c0_10, %c0_11], %17 {strides = array<i32>} : memref<16x16xf32, #tpu.memory_space<vmem>>, vector<16x16xf32>,
    } else {
    }
    %c8_i32 = arith.constant 8 : i32
    %3 = arith.muli %arg2, %c8_i32 : i32
    %c0_i32_1 = arith.constant 0 : i32
    %4 = arith.addi %3, %c0_i32_1 : i32
    %c16_i32 = arith.constant 16 : i32
    %5 = arith.muli %arg3, %c16_i32 : i32
    %c7_i32 = arith.constant 7 : i32
    %6 = arith.addi %4, %c7_i32 : i32
    %7 = arith.cmpi sle, %5, %6 : i32
    %8 = arith.extui %7 : i1 to i32
    %c0_i32_2 = arith.constant 0 : i32
    %9 = arith.cmpi ne, %8, %c0_i32_2 : i32
    scf.if %9 {
      %c0 = arith.constant 0 : index
      %c0_5 = arith.constant 0 : index
      %c0_6 = arith.constant 0 : index
      %c0_7 = arith.constant 0 : index
      %13 = vector.load %arg5[%c0, %c0_5, %c0_6, %c0_7] : memref<1x1x16x16xbf16, #tpu.memory_space<vmem>>, vector<1x1x16x16xbf16>
      %14 = vector.shape_cast %13 : vector<1x1x16x16xbf16> to vector<16x16xbf16>
      %c0_8 = arith.constant 0 : index
      %c0_9 = arith.constant 0 : index
      %c0_10 = arith.constant 0 : index
      %c0_11 = arith.constant 0 : index
      %15 = vector.load %arg6[%c0_8, %c0_9, %c0_10, %c0_11] : memref<1x1x16x16xbf16, #tpu.memory_space<vmem>>, vector<1x1x16x16xbf16>
      %16 = vector.shape_cast %15 : vector<1x1x16x16xbf16> to vector<16x16xbf16>
      %c0_12 = arith.constant 0 : index
      %c0_13 = arith.constant 0 : index
      %c0_14 = arith.constant 0 : index
      %c0_15 = arith.constant 0 : index
      %c0_16 = arith.constant 0 : index
      %17 = vector.load %arg4[%c0_12, %c0_13, %c0_14, %c0_15, %c0_16] : memref<1x1x2x8x16xbf16, #tpu.memory_space<vmem>>, vector<1x1x2x8x16xbf16>
      %18 = vector.shape_cast %17 : vector<1x1x2x8x16xbf16> to vector<2x8x16xbf16>
      %19 = arith.extf %18 : vector<2x8x16xbf16> to vector<2x8x16xf32>
      %cst = arith.constant 2.500000e-01 : f32
      %20 = vector.broadcast %cst : f32 to vector<2x8x16xf32>
      %21 = arith.mulf %19, %20 : vector<2x8x16xf32>
      %22 = arith.truncf %21 : vector<2x8x16xf32> to vector<2x8x16xbf16>
      %23 = vector.shape_cast %22 : vector<2x8x16xbf16> to vector<16x16xbf16>
      %cst_17 = arith.constant dense<0.000000e+00> : vector<16x16xf32>
      %24 = tpu.matmul %23, %14, %cst_17 {dimension_numbers = #tpu.dot_dimension_numbers<[1], [1], [0], [0], [0, 0, 1, 0], [], []>} : vector<16x16xbf16>, vector<16x16xbf16>, vector<16x16xf32> -> vector<16x16xf32>
      %c15_i32 = arith.constant 15 : i32
      %25 = arith.addi %5, %c15_i32 : i32
      %26 = arith.cmpi sle, %25, %4 : i32
      %27 = arith.extui %26 : i1 to i32
      %c0_i32_18 = arith.constant 0 : i32
      %28 = arith.cmpi ne, %27, %c0_i32_18 : i32
      scf.if %28 {
        %c0_20 = arith.constant 0 : index
        %c0_21 = arith.constant 0 : index
        %32 = vector.load %arg8[%c0_20, %c0_21] : memref<16x1xf32, #tpu.memory_space<vmem>>, vector<16x1xf32>
        %cst_22 = arith.constant dense<0xFF800000> : vector<16xf32>
        %33 = vector.multi_reduction <maximumf>, %24, %cst_22 [1] : vector<16x16xf32> to vector<16xf32>
        %34 = vector.shape_cast %33 : vector<16xf32> to vector<16x1xf32>
        %35 = arith.maximumf %32, %34 : vector<16x1xf32>
        %36 = arith.subf %32, %35 : vector<16x1xf32>
        %37 = math.exp %36 : vector<16x1xf32>
        %38 = vector.broadcast %35 : vector<16x1xf32> to vector<16x16xf32>
        %39 = arith.subf %24, %38 : vector<16x16xf32>
        %40 = math.exp %39 : vector<16x16xf32>
        %c0_23 = arith.constant 0 : index
        %c0_24 = arith.constant 0 : index
        %41 = vector.load %arg9[%c0_23, %c0_24] : memref<16x1xf32, #tpu.memory_space<vmem>>, vector<16x1xf32>
        %42 = arith.mulf %37, %41 : vector<16x1xf32>
        %cst_25 = arith.constant dense<0.000000e+00> : vector<16xf32>
        %43 = vector.multi_reduction <add>, %40, %cst_25 [1] : vector<16x16xf32> to vector<16xf32>
        %44 = vector.shape_cast %43 : vector<16xf32> to vector<16x1xf32>
        %45 = arith.addf %42, %44 : vector<16x1xf32>
        %c0_26 = arith.constant 0 : index
        %c0_27 = arith.constant 0 : index
        %46 = vector.load %arg9[%c0_26, %c0_27] : memref<16x1xf32, #tpu.memory_space<vmem>>, vector<16x1xf32>
        tpu.vector_store %arg9[%c0_26, %c0_27], %45 {strides = array<i32>} : memref<16x1xf32, #tpu.memory_space<vmem>>, vector<16x1xf32>,
        %c0_28 = arith.constant 0 : index
        %c0_29 = arith.constant 0 : index
        %47 = vector.load %arg10[%c0_28, %c0_29] : memref<16x16xf32, #tpu.memory_space<vmem>>, vector<16x16xf32>
        %48 = vector.broadcast %37 : vector<16x1xf32> to vector<16x16xf32>
        %49 = arith.mulf %48, %47 : vector<16x16xf32>
        %50 = arith.truncf %40 : vector<16x16xf32> to vector<16x16xbf16>
        %cst_30 = arith.constant dense<0.000000e+00> : vector<16x16xf32>
        %51 = tpu.matmul %50, %16, %cst_30 {dimension_numbers = #tpu.dot_dimension_numbers<[1], [0], [0], [1], [0, 0, 1, 1], [], []>} : vector<16x16xbf16>, vector<16x16xbf16>, vector<16x16xf32> -> vector<16x16xf32>
        %52 = arith.addf %49, %51 : vector<16x16xf32>
        %c0_31 = arith.constant 0 : index
        %c0_32 = arith.constant 0 : index
        %53 = vector.load %arg10[%c0_31, %c0_32] : memref<16x16xf32, #tpu.memory_space<vmem>>, vector<16x16xf32>
        tpu.vector_store %arg10[%c0_31, %c0_32], %52 {strides = array<i32>} : memref<16x16xf32, #tpu.memory_space<vmem>>, vector<16x16xf32>,
        %c0_33 = arith.constant 0 : index
        %c0_34 = arith.constant 0 : index
        %54 = vector.load %arg8[%c0_33, %c0_34] : memref<16x1xf32, #tpu.memory_space<vmem>>, vector<16x1xf32>
        tpu.vector_store %arg8[%c0_33, %c0_34], %35 {strides = array<i32>} : memref<16x1xf32, #tpu.memory_space<vmem>>, vector<16x1xf32>,
      } else {
      }
      %true = arith.constant true
      %29 = arith.xori %26, %true : i1
      %30 = arith.extui %29 : i1 to i32
      %c0_i32_19 = arith.constant 0 : i32
      %31 = arith.cmpi ne, %30, %c0_i32_19 : i32
      scf.if %31 {
        %32 = tpu.iota {dimensions = array<i32: 0>} : vector<16x1xi32>
        %c8_i32_20 = arith.constant 8 : i32
        %c0_i32_21 = arith.constant 0 : i32
        %33 = arith.cmpi eq, %c8_i32_20, %c0_i32_21 : i32
        %c1_i32 = arith.constant 1 : i32
        %34 = arith.select %33, %c1_i32, %c8_i32_20 : i32
        %35 = vector.broadcast %34 : i32 to vector<16x1xi32>
        %36 = arith.remsi %32, %35 : vector<16x1xi32>
        %c0_i32_22 = arith.constant 0 : i32
        %37 = vector.broadcast %c0_i32_22 : i32 to vector<16x1xi32>
        %38 = arith.cmpi ne, %36, %37 : vector<16x1xi32>
        %c0_i32_23 = arith.constant 0 : i32
        %39 = vector.broadcast %c0_i32_23 : i32 to vector<16x1xi32>
        %40 = arith.cmpi slt, %36, %39 : vector<16x1xi32>
        %c0_i32_24 = arith.constant 0 : i32
        %41 = arith.cmpi slt, %34, %c0_i32_24 : i32
        %42 = vector.broadcast %41 : i1 to vector<16x1xi1>
        %43 = vector.broadcast %42 : vector<16x1xi1> to vector<16x1xi1>
        %44 = arith.xori %40, %43 : vector<16x1xi1>
        %45 = arith.andi %44, %38 : vector<16x1xi1>
        %46 = vector.broadcast %34 : i32 to vector<16x1xi32>
        %47 = arith.addi %36, %46 : vector<16x1xi32>
        %48 = arith.select %45, %47, %36 : vector<16x1xi1>, vector<16x1xi32>
        %49 = vector.broadcast %4 : i32 to vector<16x1xi32>
        %50 = arith.addi %49, %48 : vector<16x1xi32>
        %51 = tpu.iota {dimensions = array<i32: 1>} : vector<1x16xi32>
        %52 = vector.broadcast %5 : i32 to vector<1x16xi32>
        %53 = arith.addi %52, %51 : vector<1x16xi32>
        %54 = vector.broadcast %53 : vector<1x16xi32> to vector<16x16xi32>
        %55 = vector.broadcast %50 : vector<16x1xi32> to vector<16x16xi32>
        %56 = arith.cmpi sle, %54, %55 : vector<16x16xi32>
        %cst_25 = arith.constant -1.000000e+30 : f32
        %57 = vector.broadcast %cst_25 : f32 to vector<16x16xf32>
        %58 = arith.select %56, %24, %57 : vector<16x16xi1>, vector<16x16xf32>
        %c0_26 = arith.constant 0 : index
        %c0_27 = arith.constant 0 : index
        %59 = vector.load %arg8[%c0_26, %c0_27] : memref<16x1xf32, #tpu.memory_space<vmem>>, vector<16x1xf32>
        %cst_28 = arith.constant dense<0xFF800000> : vector<16xf32>
        %60 = vector.multi_reduction <maximumf>, %58, %cst_28 [1] : vector<16x16xf32> to vector<16xf32>
        %61 = vector.shape_cast %60 : vector<16xf32> to vector<16x1xf32>
        %62 = arith.maximumf %59, %61 : vector<16x1xf32>
        %63 = arith.subf %59, %62 : vector<16x1xf32>
        %64 = math.exp %63 : vector<16x1xf32>
        %65 = vector.broadcast %62 : vector<16x1xf32> to vector<16x16xf32>
        %66 = arith.subf %58, %65 : vector<16x16xf32>
        %67 = math.exp %66 : vector<16x16xf32>
        %c0_29 = arith.constant 0 : index
        %c0_30 = arith.constant 0 : index
        %68 = vector.load %arg9[%c0_29, %c0_30] : memref<16x1xf32, #tpu.memory_space<vmem>>, vector<16x1xf32>
        %69 = arith.mulf %64, %68 : vector<16x1xf32>
        %cst_31 = arith.constant dense<0.000000e+00> : vector<16xf32>
        %70 = vector.multi_reduction <add>, %67, %cst_31 [1] : vector<16x16xf32> to vector<16xf32>
        %71 = vector.shape_cast %70 : vector<16xf32> to vector<16x1xf32>
        %72 = arith.addf %69, %71 : vector<16x1xf32>
        %c0_32 = arith.constant 0 : index
        %c0_33 = arith.constant 0 : index
        %73 = vector.load %arg9[%c0_32, %c0_33] : memref<16x1xf32, #tpu.memory_space<vmem>>, vector<16x1xf32>
        tpu.vector_store %arg9[%c0_32, %c0_33], %72 {strides = array<i32>} : memref<16x1xf32, #tpu.memory_space<vmem>>, vector<16x1xf32>,
        %c0_34 = arith.constant 0 : index
        %c0_35 = arith.constant 0 : index
        %74 = vector.load %arg10[%c0_34, %c0_35] : memref<16x16xf32, #tpu.memory_space<vmem>>, vector<16x16xf32>
        %75 = vector.broadcast %64 : vector<16x1xf32> to vector<16x16xf32>
        %76 = arith.mulf %75, %74 : vector<16x16xf32>
        %77 = arith.truncf %67 : vector<16x16xf32> to vector<16x16xbf16>
        %cst_36 = arith.constant dense<0.000000e+00> : vector<16x16xf32>
        %78 = tpu.matmul %77, %16, %cst_36 {dimension_numbers = #tpu.dot_dimension_numbers<[1], [0], [0], [1], [0, 0, 1, 1], [], []>} : vector<16x16xbf16>, vector<16x16xbf16>, vector<16x16xf32> -> vector<16x16xf32>
        %79 = arith.addf %76, %78 : vector<16x16xf32>
        %c0_37 = arith.constant 0 : index
        %c0_38 = arith.constant 0 : index
        %80 = vector.load %arg10[%c0_37, %c0_38] : memref<16x16xf32, #tpu.memory_space<vmem>>, vector<16x16xf32>
        tpu.vector_store %arg10[%c0_37, %c0_38], %79 {strides = array<i32>} : memref<16x16xf32, #tpu.memory_space<vmem>>, vector<16x16xf32>,
        %c0_39 = arith.constant 0 : index
        %c0_40 = arith.constant 0 : index
        %81 = vector.load %arg8[%c0_39, %c0_40] : memref<16x1xf32, #tpu.memory_space<vmem>>, vector<16x1xf32>
        tpu.vector_store %arg8[%c0_39, %c0_40], %62 {strides = array<i32>} : memref<16x1xf32, #tpu.memory_space<vmem>>, vector<16x1xf32>,
      } else {
      }
    } else {
    }
    %c0_i32_3 = arith.constant 0 : i32
    %10 = arith.cmpi eq, %arg3, %c0_i32_3 : i32
    %11 = arith.extui %10 : i1 to i32
    %c0_i32_4 = arith.constant 0 : i32
    %12 = arith.cmpi ne, %11, %c0_i32_4 : i32
    scf.if %12 {
      %c0 = arith.constant 0 : index
      %c0_5 = arith.constant 0 : index
      %13 = vector.load %arg9[%c0, %c0_5] : memref<16x1xf32, #tpu.memory_space<vmem>>, vector<16x1xf32>
      %14 = tpu.reciprocal %13 : vector<16x1xf32> -> vector<16x1xf32>
      %c0_6 = arith.constant 0 : index
      %c0_7 = arith.constant 0 : index
      %15 = vector.load %arg10[%c0_6, %c0_7] : memref<16x16xf32, #tpu.memory_space<vmem>>, vector<16x16xf32>
      %16 = vector.broadcast %14 : vector<16x1xf32> to vector<16x16xf32>
      %17 = arith.mulf %15, %16 : vector<16x16xf32>
      %18 = arith.truncf %17 : vector<16x16xf32> to vector<16x16xbf16>
      %19 = vector.extract_strided_slice %18 {offsets = [0, 0], sizes = [8, 16], strides = [1, 1]} : vector<16x16xbf16> to vector<8x16xbf16>
      %c0_8 = arith.constant 0 : index
      %c0_9 = arith.constant 0 : index
      %c0_10 = arith.constant 0 : index
      %c0_11 = arith.constant 0 : index
      %c0_12 = arith.constant 0 : index
      %20 = vector.load %arg7[%c0_8, %c0_9, %c0_10, %c0_11, %c0_12] : memref<1x8x1x2x16xbf16, #tpu.memory_space<vmem>>, vector<1x8x1x1x16xbf16>
      %21 = vector.shape_cast %20 : vector<1x8x1x1x16xbf16> to vector<8x16xbf16>
      %22 = vector.shape_cast %19 : vector<8x16xbf16> to vector<1x8x1x1x16xbf16>
      tpu.vector_store %arg7[%c0_8, %c0_9, %c0_10, %c0_11, %c0_12], %22 {strides = array<i32>} : memref<1x8x1x2x16xbf16, #tpu.memory_space<vmem>>, vector<1x8x1x1x16xbf16>,
      %23 = vector.extract_strided_slice %18 {offsets = [8, 0], sizes = [8, 16], strides = [1, 1]} : vector<16x16xbf16> to vector<8x16xbf16>
      %c0_13 = arith.constant 0 : index
      %c0_14 = arith.constant 0 : index
      %c0_15 = arith.constant 0 : index
      %c1 = arith.constant 1 : index
      %c0_16 = arith.constant 0 : index
      %24 = vector.load %arg7[%c0_13, %c0_14, %c0_15, %c1, %c0_16] : memref<1x8x1x2x16xbf16, #tpu.memory_space<vmem>>, vector<1x8x1x1x16xbf16>
      %25 = vector.shape_cast %24 : vector<1x8x1x1x16xbf16> to vector<8x16xbf16>
      %26 = vector.shape_cast %23 : vector<8x16xbf16> to vector<1x8x1x1x16xbf16>
      tpu.vector_store %arg7[%c0_13, %c0_14, %c0_15, %c1, %c0_16], %26 {strides = array<i32>} : memref<1x8x1x2x16xbf16, #tpu.memory_space<vmem>>, vector<1x8x1x1x16xbf16>,
    } else {
    }
    return
  }
  func.func @transform_0(%arg0: i32, %arg1: i32, %arg2: i32, %arg3: i32) -> (i32, i32, i32, i32, i32) {
    %c0_i32 = arith.constant 0 : i32
    %c0_i32_0 = arith.constant 0 : i32
    %c0_i32_1 = arith.constant 0 : i32
    return %arg0, %arg1, %c0_i32, %arg2, %c0_i32_0 : i32, i32, i32, i32, i32
  }
  func.func @transform_1(%arg0: i32, %arg1: i32, %arg2: i32, %arg3: i32) -> (i32, i32, i32, i32) {
    %c0_i32 = arith.constant 0 : i32
    %c0_i32_0 = arith.constant 0 : i32
    return %arg0, %arg1, %arg3, %c0_i32 : i32, i32, i32, i32
  }
  func.func @transform_2(%arg0: i32, %arg1: i32, %arg2: i32, %arg3: i32) -> (i32, i32, i32, i32) {
    %c0_i32 = arith.constant 0 : i32
    %c0_i32_0 = arith.constant 0 : i32
    return %arg0, %arg1, %arg3, %c0_i32 : i32, i32, i32, i32
  }
  func.func @transform_3(%arg0: i32, %arg1: i32, %arg2: i32, %arg3: i32) -> (i32, i32, i32, i32, i32) {
    %c0_i32 = arith.constant 0 : i32
    %c0_i32_0 = arith.constant 0 : i32
    %c0_i32_1 = arith.constant 0 : i32
    return %arg0, %arg2, %arg1, %c0_i32, %c0_i32_0 : i32, i32, i32, i32, i32
  }
}

module attributes {stable_mosaic.version = 11 : i64} {
  func.func @_ffn_gate_kernel(%arg0: i32, %arg1: i32, %arg2: i32, %arg3: memref<16x64xbf16, #tpu.memory_space<vmem>>, %arg4: memref<64x192xbf16, #tpu.memory_space<vmem>>, %arg5: memref<64x192xbf16, #tpu.memory_space<vmem>>, %arg6: memref<16x192xbf16, #tpu.memory_space<vmem>>, %arg7: memref<16x192xf32, #tpu.memory_space<vmem>>, %arg8: memref<16x192xf32, #tpu.memory_space<vmem>>) attributes {dimension_semantics = [#tpu.dimension_semantics<parallel>, #tpu.dimension_semantics<parallel>, #tpu.dimension_semantics<arbitrary>], iteration_bounds = array<i64: 1, 1, 1>, scalar_prefetch = 0 : i64, scratch_operands = 2 : i64, tpu.core_type = #tpu.core_type<tc>, window_params = [{transform_indices = @transform_0, window_bounds = array<i64: 16, 64>}, {transform_indices = @transform_1, window_bounds = array<i64: 64, 192>}, {transform_indices = @transform_2, window_bounds = array<i64: 64, 192>}, {transform_indices = @transform_3, window_bounds = array<i64: 16, 192>}]} {
    %c0_i32 = arith.constant 0 : i32
    %0 = arith.cmpi eq, %arg2, %c0_i32 : i32
    %1 = arith.extui %0 : i1 to i32
    %c0_i32_0 = arith.constant 0 : i32
    %2 = arith.cmpi ne, %1, %c0_i32_0 : i32
    scf.if %2 {
      %cst_17 = arith.constant 0.000000e+00 : f32
      %17 = vector.broadcast %cst_17 : f32 to vector<16x192xf32>
      %c0_18 = arith.constant 0 : index
      %c0_19 = arith.constant 0 : index
      %18 = vector.load %arg7[%c0_18, %c0_19] : memref<16x192xf32, #tpu.memory_space<vmem>>, vector<16x192xf32>
      tpu.vector_store %arg7[%c0_18, %c0_19], %17 {strides = array<i32>} : memref<16x192xf32, #tpu.memory_space<vmem>>, vector<16x192xf32>,
      %cst_20 = arith.constant 0.000000e+00 : f32
      %19 = vector.broadcast %cst_20 : f32 to vector<16x192xf32>
      %c0_21 = arith.constant 0 : index
      %c0_22 = arith.constant 0 : index
      %20 = vector.load %arg8[%c0_21, %c0_22] : memref<16x192xf32, #tpu.memory_space<vmem>>, vector<16x192xf32>
      tpu.vector_store %arg8[%c0_21, %c0_22], %19 {strides = array<i32>} : memref<16x192xf32, #tpu.memory_space<vmem>>, vector<16x192xf32>,
    } else {
    }
    %c0 = arith.constant 0 : index
    %c0_1 = arith.constant 0 : index
    %3 = vector.load %arg3[%c0, %c0_1] : memref<16x64xbf16, #tpu.memory_space<vmem>>, vector<16x64xbf16>
    %c0_2 = arith.constant 0 : index
    %c0_3 = arith.constant 0 : index
    %4 = vector.load %arg7[%c0_2, %c0_3] : memref<16x192xf32, #tpu.memory_space<vmem>>, vector<16x192xf32>
    %c0_4 = arith.constant 0 : index
    %c0_5 = arith.constant 0 : index
    %5 = vector.load %arg4[%c0_4, %c0_5] : memref<64x192xbf16, #tpu.memory_space<vmem>>, vector<64x192xbf16>
    %cst = arith.constant dense<0.000000e+00> : vector<16x192xf32>
    %6 = tpu.matmul %3, %5, %cst {dimension_numbers = #tpu.dot_dimension_numbers<[1], [0], [0], [1], [0, 0, 1, 1], [], []>} : vector<16x64xbf16>, vector<64x192xbf16>, vector<16x192xf32> -> vector<16x192xf32>
    %7 = arith.addf %4, %6 : vector<16x192xf32>
    %c0_6 = arith.constant 0 : index
    %c0_7 = arith.constant 0 : index
    %8 = vector.load %arg7[%c0_6, %c0_7] : memref<16x192xf32, #tpu.memory_space<vmem>>, vector<16x192xf32>
    tpu.vector_store %arg7[%c0_6, %c0_7], %7 {strides = array<i32>} : memref<16x192xf32, #tpu.memory_space<vmem>>, vector<16x192xf32>,
    %c0_8 = arith.constant 0 : index
    %c0_9 = arith.constant 0 : index
    %9 = vector.load %arg8[%c0_8, %c0_9] : memref<16x192xf32, #tpu.memory_space<vmem>>, vector<16x192xf32>
    %c0_10 = arith.constant 0 : index
    %c0_11 = arith.constant 0 : index
    %10 = vector.load %arg5[%c0_10, %c0_11] : memref<64x192xbf16, #tpu.memory_space<vmem>>, vector<64x192xbf16>
    %cst_12 = arith.constant dense<0.000000e+00> : vector<16x192xf32>
    %11 = tpu.matmul %3, %10, %cst_12 {dimension_numbers = #tpu.dot_dimension_numbers<[1], [0], [0], [1], [0, 0, 1, 1], [], []>} : vector<16x64xbf16>, vector<64x192xbf16>, vector<16x192xf32> -> vector<16x192xf32>
    %12 = arith.addf %9, %11 : vector<16x192xf32>
    %c0_13 = arith.constant 0 : index
    %c0_14 = arith.constant 0 : index
    %13 = vector.load %arg8[%c0_13, %c0_14] : memref<16x192xf32, #tpu.memory_space<vmem>>, vector<16x192xf32>
    tpu.vector_store %arg8[%c0_13, %c0_14], %12 {strides = array<i32>} : memref<16x192xf32, #tpu.memory_space<vmem>>, vector<16x192xf32>,
    %c0_i32_15 = arith.constant 0 : i32
    %14 = arith.cmpi eq, %arg2, %c0_i32_15 : i32
    %15 = arith.extui %14 : i1 to i32
    %c0_i32_16 = arith.constant 0 : i32
    %16 = arith.cmpi ne, %15, %c0_i32_16 : i32
    scf.if %16 {
      %c0_17 = arith.constant 0 : index
      %c0_18 = arith.constant 0 : index
      %17 = vector.load %arg7[%c0_17, %c0_18] : memref<16x192xf32, #tpu.memory_space<vmem>>, vector<16x192xf32>
      %18 = arith.negf %17 : vector<16x192xf32>
      %19 = math.exp %18 : vector<16x192xf32>
      %cst_19 = arith.constant 1.000000e+00 : f32
      %20 = vector.broadcast %cst_19 : f32 to vector<16x192xf32>
      %21 = arith.addf %20, %19 : vector<16x192xf32>
      %22 = arith.divf %20, %21 : vector<16x192xf32>
      %23 = arith.mulf %17, %22 : vector<16x192xf32>
      %c0_20 = arith.constant 0 : index
      %c0_21 = arith.constant 0 : index
      %24 = vector.load %arg8[%c0_20, %c0_21] : memref<16x192xf32, #tpu.memory_space<vmem>>, vector<16x192xf32>
      %25 = arith.mulf %23, %24 : vector<16x192xf32>
      %26 = arith.truncf %25 : vector<16x192xf32> to vector<16x192xbf16>
      %c0_22 = arith.constant 0 : index
      %c0_23 = arith.constant 0 : index
      %27 = vector.load %arg6[%c0_22, %c0_23] : memref<16x192xbf16, #tpu.memory_space<vmem>>, vector<16x192xbf16>
      tpu.vector_store %arg6[%c0_22, %c0_23], %26 {strides = array<i32>} : memref<16x192xbf16, #tpu.memory_space<vmem>>, vector<16x192xbf16>,
    } else {
    }
    return
  }
  func.func @transform_0(%arg0: i32, %arg1: i32, %arg2: i32) -> (i32, i32) {
    %c0_i32 = arith.constant 0 : i32
    return %arg0, %arg2 : i32, i32
  }
  func.func @transform_1(%arg0: i32, %arg1: i32, %arg2: i32) -> (i32, i32) {
    %c0_i32 = arith.constant 0 : i32
    return %arg2, %arg1 : i32, i32
  }
  func.func @transform_2(%arg0: i32, %arg1: i32, %arg2: i32) -> (i32, i32) {
    %c0_i32 = arith.constant 0 : i32
    return %arg2, %arg1 : i32, i32
  }
  func.func @transform_3(%arg0: i32, %arg1: i32, %arg2: i32) -> (i32, i32) {
    %c0_i32 = arith.constant 0 : i32
    return %arg0, %arg1 : i32, i32
  }
}

module attributes {stable_mosaic.version = 11 : i64} {
  func.func @_matmul_res_kernel(%arg0: i32, %arg1: i32, %arg2: i32, %arg3: memref<16x64xbf16, #tpu.memory_space<vmem>>, %arg4: memref<64x64xbf16, #tpu.memory_space<vmem>>, %arg5: memref<16x64xbf16, #tpu.memory_space<vmem>>, %arg6: memref<16x64xbf16, #tpu.memory_space<vmem>>, %arg7: memref<16x64xf32, #tpu.memory_space<vmem>>) attributes {dimension_semantics = [#tpu.dimension_semantics<parallel>, #tpu.dimension_semantics<parallel>, #tpu.dimension_semantics<arbitrary>], iteration_bounds = array<i64: 1, 1, 1>, scalar_prefetch = 0 : i64, scratch_operands = 1 : i64, tpu.core_type = #tpu.core_type<tc>, window_params = [{transform_indices = @transform_0, window_bounds = array<i64: 16, 64>}, {transform_indices = @transform_1, window_bounds = array<i64: 64, 64>}, {transform_indices = @transform_2, window_bounds = array<i64: 16, 64>}, {transform_indices = @transform_3, window_bounds = array<i64: 16, 64>}]} {
    %c0_i32 = arith.constant 0 : i32
    %0 = arith.cmpi eq, %arg2, %c0_i32 : i32
    %1 = arith.extui %0 : i1 to i32
    %c0_i32_0 = arith.constant 0 : i32
    %2 = arith.cmpi ne, %1, %c0_i32_0 : i32
    scf.if %2 {
      %cst_10 = arith.constant 0.000000e+00 : f32
      %12 = vector.broadcast %cst_10 : f32 to vector<16x64xf32>
      %c0_11 = arith.constant 0 : index
      %c0_12 = arith.constant 0 : index
      %13 = vector.load %arg7[%c0_11, %c0_12] : memref<16x64xf32, #tpu.memory_space<vmem>>, vector<16x64xf32>
      tpu.vector_store %arg7[%c0_11, %c0_12], %12 {strides = array<i32>} : memref<16x64xf32, #tpu.memory_space<vmem>>, vector<16x64xf32>,
    } else {
    }
    %c0 = arith.constant 0 : index
    %c0_1 = arith.constant 0 : index
    %3 = vector.load %arg7[%c0, %c0_1] : memref<16x64xf32, #tpu.memory_space<vmem>>, vector<16x64xf32>
    %c0_2 = arith.constant 0 : index
    %c0_3 = arith.constant 0 : index
    %4 = vector.load %arg3[%c0_2, %c0_3] : memref<16x64xbf16, #tpu.memory_space<vmem>>, vector<16x64xbf16>
    %c0_4 = arith.constant 0 : index
    %c0_5 = arith.constant 0 : index
    %5 = vector.load %arg4[%c0_4, %c0_5] : memref<64x64xbf16, #tpu.memory_space<vmem>>, vector<64x64xbf16>
    %cst = arith.constant dense<0.000000e+00> : vector<16x64xf32>
    %6 = tpu.matmul %4, %5, %cst {dimension_numbers = #tpu.dot_dimension_numbers<[1], [0], [0], [1], [0, 0, 1, 1], [], []>} : vector<16x64xbf16>, vector<64x64xbf16>, vector<16x64xf32> -> vector<16x64xf32>
    %7 = arith.addf %3, %6 : vector<16x64xf32>
    %c0_6 = arith.constant 0 : index
    %c0_7 = arith.constant 0 : index
    %8 = vector.load %arg7[%c0_6, %c0_7] : memref<16x64xf32, #tpu.memory_space<vmem>>, vector<16x64xf32>
    tpu.vector_store %arg7[%c0_6, %c0_7], %7 {strides = array<i32>} : memref<16x64xf32, #tpu.memory_space<vmem>>, vector<16x64xf32>,
    %c0_i32_8 = arith.constant 0 : i32
    %9 = arith.cmpi eq, %arg2, %c0_i32_8 : i32
    %10 = arith.extui %9 : i1 to i32
    %c0_i32_9 = arith.constant 0 : i32
    %11 = arith.cmpi ne, %10, %c0_i32_9 : i32
    scf.if %11 {
      %c0_10 = arith.constant 0 : index
      %c0_11 = arith.constant 0 : index
      %12 = vector.load %arg7[%c0_10, %c0_11] : memref<16x64xf32, #tpu.memory_space<vmem>>, vector<16x64xf32>
      %c0_12 = arith.constant 0 : index
      %c0_13 = arith.constant 0 : index
      %13 = vector.load %arg5[%c0_12, %c0_13] : memref<16x64xbf16, #tpu.memory_space<vmem>>, vector<16x64xbf16>
      %14 = arith.extf %13 : vector<16x64xbf16> to vector<16x64xf32>
      %15 = arith.addf %12, %14 : vector<16x64xf32>
      %16 = arith.truncf %15 : vector<16x64xf32> to vector<16x64xbf16>
      %c0_14 = arith.constant 0 : index
      %c0_15 = arith.constant 0 : index
      %17 = vector.load %arg6[%c0_14, %c0_15] : memref<16x64xbf16, #tpu.memory_space<vmem>>, vector<16x64xbf16>
      tpu.vector_store %arg6[%c0_14, %c0_15], %16 {strides = array<i32>} : memref<16x64xbf16, #tpu.memory_space<vmem>>, vector<16x64xbf16>,
    } else {
    }
    return
  }
  func.func @transform_0(%arg0: i32, %arg1: i32, %arg2: i32) -> (i32, i32) {
    %c0_i32 = arith.constant 0 : i32
    return %arg0, %arg2 : i32, i32
  }
  func.func @transform_1(%arg0: i32, %arg1: i32, %arg2: i32) -> (i32, i32) {
    %c0_i32 = arith.constant 0 : i32
    return %arg2, %arg1 : i32, i32
  }
  func.func @transform_2(%arg0: i32, %arg1: i32, %arg2: i32) -> (i32, i32) {
    %c0_i32 = arith.constant 0 : i32
    return %arg0, %arg1 : i32, i32
  }
  func.func @transform_3(%arg0: i32, %arg1: i32, %arg2: i32) -> (i32, i32) {
    %c0_i32 = arith.constant 0 : i32
    return %arg0, %arg1 : i32, i32
  }
}

module attributes {stable_mosaic.version = 11 : i64} {
  func.func @_matmul_res_kernel(%arg0: i32, %arg1: i32, %arg2: i32, %arg3: memref<16x192xbf16, #tpu.memory_space<vmem>>, %arg4: memref<192x64xbf16, #tpu.memory_space<vmem>>, %arg5: memref<16x64xbf16, #tpu.memory_space<vmem>>, %arg6: memref<16x64xbf16, #tpu.memory_space<vmem>>, %arg7: memref<16x64xf32, #tpu.memory_space<vmem>>) attributes {dimension_semantics = [#tpu.dimension_semantics<parallel>, #tpu.dimension_semantics<parallel>, #tpu.dimension_semantics<arbitrary>], iteration_bounds = array<i64: 1, 1, 1>, scalar_prefetch = 0 : i64, scratch_operands = 1 : i64, tpu.core_type = #tpu.core_type<tc>, window_params = [{transform_indices = @transform_0, window_bounds = array<i64: 16, 192>}, {transform_indices = @transform_1, window_bounds = array<i64: 192, 64>}, {transform_indices = @transform_2, window_bounds = array<i64: 16, 64>}, {transform_indices = @transform_3, window_bounds = array<i64: 16, 64>}]} {
    %c0_i32 = arith.constant 0 : i32
    %0 = arith.cmpi eq, %arg2, %c0_i32 : i32
    %1 = arith.extui %0 : i1 to i32
    %c0_i32_0 = arith.constant 0 : i32
    %2 = arith.cmpi ne, %1, %c0_i32_0 : i32
    scf.if %2 {
      %cst_10 = arith.constant 0.000000e+00 : f32
      %12 = vector.broadcast %cst_10 : f32 to vector<16x64xf32>
      %c0_11 = arith.constant 0 : index
      %c0_12 = arith.constant 0 : index
      %13 = vector.load %arg7[%c0_11, %c0_12] : memref<16x64xf32, #tpu.memory_space<vmem>>, vector<16x64xf32>
      tpu.vector_store %arg7[%c0_11, %c0_12], %12 {strides = array<i32>} : memref<16x64xf32, #tpu.memory_space<vmem>>, vector<16x64xf32>,
    } else {
    }
    %c0 = arith.constant 0 : index
    %c0_1 = arith.constant 0 : index
    %3 = vector.load %arg7[%c0, %c0_1] : memref<16x64xf32, #tpu.memory_space<vmem>>, vector<16x64xf32>
    %c0_2 = arith.constant 0 : index
    %c0_3 = arith.constant 0 : index
    %4 = vector.load %arg3[%c0_2, %c0_3] : memref<16x192xbf16, #tpu.memory_space<vmem>>, vector<16x192xbf16>
    %c0_4 = arith.constant 0 : index
    %c0_5 = arith.constant 0 : index
    %5 = vector.load %arg4[%c0_4, %c0_5] : memref<192x64xbf16, #tpu.memory_space<vmem>>, vector<192x64xbf16>
    %cst = arith.constant dense<0.000000e+00> : vector<16x64xf32>
    %6 = tpu.matmul %4, %5, %cst {dimension_numbers = #tpu.dot_dimension_numbers<[1], [0], [0], [1], [0, 0, 1, 1], [], []>} : vector<16x192xbf16>, vector<192x64xbf16>, vector<16x64xf32> -> vector<16x64xf32>
    %7 = arith.addf %3, %6 : vector<16x64xf32>
    %c0_6 = arith.constant 0 : index
    %c0_7 = arith.constant 0 : index
    %8 = vector.load %arg7[%c0_6, %c0_7] : memref<16x64xf32, #tpu.memory_space<vmem>>, vector<16x64xf32>
    tpu.vector_store %arg7[%c0_6, %c0_7], %7 {strides = array<i32>} : memref<16x64xf32, #tpu.memory_space<vmem>>, vector<16x64xf32>,
    %c0_i32_8 = arith.constant 0 : i32
    %9 = arith.cmpi eq, %arg2, %c0_i32_8 : i32
    %10 = arith.extui %9 : i1 to i32
    %c0_i32_9 = arith.constant 0 : i32
    %11 = arith.cmpi ne, %10, %c0_i32_9 : i32
    scf.if %11 {
      %c0_10 = arith.constant 0 : index
      %c0_11 = arith.constant 0 : index
      %12 = vector.load %arg7[%c0_10, %c0_11] : memref<16x64xf32, #tpu.memory_space<vmem>>, vector<16x64xf32>
      %c0_12 = arith.constant 0 : index
      %c0_13 = arith.constant 0 : index
      %13 = vector.load %arg5[%c0_12, %c0_13] : memref<16x64xbf16, #tpu.memory_space<vmem>>, vector<16x64xbf16>
      %14 = arith.extf %13 : vector<16x64xbf16> to vector<16x64xf32>
      %15 = arith.addf %12, %14 : vector<16x64xf32>
      %16 = arith.truncf %15 : vector<16x64xf32> to vector<16x64xbf16>
      %c0_14 = arith.constant 0 : index
      %c0_15 = arith.constant 0 : index
      %17 = vector.load %arg6[%c0_14, %c0_15] : memref<16x64xbf16, #tpu.memory_space<vmem>>, vector<16x64xbf16>
      tpu.vector_store %arg6[%c0_14, %c0_15], %16 {strides = array<i32>} : memref<16x64xbf16, #tpu.memory_space<vmem>>, vector<16x64xbf16>,
    } else {
    }
    return
  }
  func.func @transform_0(%arg0: i32, %arg1: i32, %arg2: i32) -> (i32, i32) {
    %c0_i32 = arith.constant 0 : i32
    return %arg0, %arg2 : i32, i32
  }
  func.func @transform_1(%arg0: i32, %arg1: i32, %arg2: i32) -> (i32, i32) {
    %c0_i32 = arith.constant 0 : i32
    return %arg2, %arg1 : i32, i32
  }
  func.func @transform_2(%arg0: i32, %arg1: i32, %arg2: i32) -> (i32, i32) {
    %c0_i32 = arith.constant 0 : i32
    return %arg0, %arg1 : i32, i32
  }
  func.func @transform_3(%arg0: i32, %arg1: i32, %arg2: i32) -> (i32, i32) {
    %c0_i32 = arith.constant 0 : i32
    return %arg0, %arg1 : i32, i32
  }
}

module attributes {stable_mosaic.version = 11 : i64} {
  func.func @_matmul_kernel(%arg0: i32, %arg1: i32, %arg2: i32, %arg3: memref<16x64xbf16, #tpu.memory_space<vmem>>, %arg4: memref<64x96xbf16, #tpu.memory_space<vmem>>, %arg5: memref<16x96xf32, #tpu.memory_space<vmem>>, %arg6: memref<16x96xf32, #tpu.memory_space<vmem>>) attributes {dimension_semantics = [#tpu.dimension_semantics<parallel>, #tpu.dimension_semantics<parallel>, #tpu.dimension_semantics<arbitrary>], iteration_bounds = array<i64: 1, 1, 1>, scalar_prefetch = 0 : i64, scratch_operands = 1 : i64, tpu.core_type = #tpu.core_type<tc>, window_params = [{transform_indices = @transform_0, window_bounds = array<i64: 16, 64>}, {transform_indices = @transform_1, window_bounds = array<i64: 64, 96>}, {transform_indices = @transform_2, window_bounds = array<i64: 16, 96>}]} {
    %c0_i32 = arith.constant 0 : i32
    %0 = arith.cmpi eq, %arg2, %c0_i32 : i32
    %1 = arith.extui %0 : i1 to i32
    %c0_i32_0 = arith.constant 0 : i32
    %2 = arith.cmpi ne, %1, %c0_i32_0 : i32
    scf.if %2 {
      %cst_10 = arith.constant 0.000000e+00 : f32
      %12 = vector.broadcast %cst_10 : f32 to vector<16x96xf32>
      %c0_11 = arith.constant 0 : index
      %c0_12 = arith.constant 0 : index
      %13 = vector.load %arg6[%c0_11, %c0_12] : memref<16x96xf32, #tpu.memory_space<vmem>>, vector<16x96xf32>
      tpu.vector_store %arg6[%c0_11, %c0_12], %12 {strides = array<i32>} : memref<16x96xf32, #tpu.memory_space<vmem>>, vector<16x96xf32>,
    } else {
    }
    %c0 = arith.constant 0 : index
    %c0_1 = arith.constant 0 : index
    %3 = vector.load %arg6[%c0, %c0_1] : memref<16x96xf32, #tpu.memory_space<vmem>>, vector<16x96xf32>
    %c0_2 = arith.constant 0 : index
    %c0_3 = arith.constant 0 : index
    %4 = vector.load %arg3[%c0_2, %c0_3] : memref<16x64xbf16, #tpu.memory_space<vmem>>, vector<16x64xbf16>
    %c0_4 = arith.constant 0 : index
    %c0_5 = arith.constant 0 : index
    %5 = vector.load %arg4[%c0_4, %c0_5] : memref<64x96xbf16, #tpu.memory_space<vmem>>, vector<64x96xbf16>
    %cst = arith.constant dense<0.000000e+00> : vector<16x96xf32>
    %6 = tpu.matmul %4, %5, %cst {dimension_numbers = #tpu.dot_dimension_numbers<[1], [0], [0], [1], [0, 0, 1, 1], [], []>} : vector<16x64xbf16>, vector<64x96xbf16>, vector<16x96xf32> -> vector<16x96xf32>
    %7 = arith.addf %3, %6 : vector<16x96xf32>
    %c0_6 = arith.constant 0 : index
    %c0_7 = arith.constant 0 : index
    %8 = vector.load %arg6[%c0_6, %c0_7] : memref<16x96xf32, #tpu.memory_space<vmem>>, vector<16x96xf32>
    tpu.vector_store %arg6[%c0_6, %c0_7], %7 {strides = array<i32>} : memref<16x96xf32, #tpu.memory_space<vmem>>, vector<16x96xf32>,
    %c0_i32_8 = arith.constant 0 : i32
    %9 = arith.cmpi eq, %arg2, %c0_i32_8 : i32
    %10 = arith.extui %9 : i1 to i32
    %c0_i32_9 = arith.constant 0 : i32
    %11 = arith.cmpi ne, %10, %c0_i32_9 : i32
    scf.if %11 {
      %c0_10 = arith.constant 0 : index
      %c0_11 = arith.constant 0 : index
      %12 = vector.load %arg6[%c0_10, %c0_11] : memref<16x96xf32, #tpu.memory_space<vmem>>, vector<16x96xf32>
      %c0_12 = arith.constant 0 : index
      %c0_13 = arith.constant 0 : index
      %13 = vector.load %arg5[%c0_12, %c0_13] : memref<16x96xf32, #tpu.memory_space<vmem>>, vector<16x96xf32>
      tpu.vector_store %arg5[%c0_12, %c0_13], %12 {strides = array<i32>} : memref<16x96xf32, #tpu.memory_space<vmem>>, vector<16x96xf32>,
    } else {
    }
    return
  }
  func.func @transform_0(%arg0: i32, %arg1: i32, %arg2: i32) -> (i32, i32) {
    %c0_i32 = arith.constant 0 : i32
    return %arg0, %arg2 : i32, i32
  }
  func.func @transform_1(%arg0: i32, %arg1: i32, %arg2: i32) -> (i32, i32) {
    %c0_i32 = arith.constant 0 : i32
    return %arg2, %arg1 : i32, i32
  }
  func.func @transform_2(%arg0: i32, %arg1: i32, %arg2: i32) -> (i32, i32) {
    %c0_i32 = arith.constant 0 : i32
    return %arg0, %arg1 : i32, i32
  }
}

</mosaic_0001>

<llo_original>
// kernel: transformer_forward.16
$region0: #{transformer_forward.16}
  #allocation0 [shape = 'u32[]', space=smem, size = 0x4, offset = 0x4, fixed_abs, tag = 'smem constant byte address 0x4 - core index']
  #allocation1 [shape = 'u32[72,128]{1,0:T(1,128)}', space=vmem, size = 0x9000, scoped, tag = 'internal scratch']
  %s0 = inlined_call_operand.vmem [shape: bf16[16,64], index: 0, kind: input, shape index: {}]
  %s1 = inlined_call_operand.vmem [shape: f32[1,64], index: 1, kind: input, shape index: {}]
  %s2 = inlined_call_operand.vmem [shape: bf16[16,64], index: 2, kind: output, shape index: {}]
  %s3 = sld [smem:[#allocation0]]
  $region18: #{transformer_forward.16} parent=0
    _
  %s5 = ssub.s32 1, %s3
  %s6 = scalar_select 0, %s5, %s3
  // Predicated region
  $region2: #{transformer_forward.16} parent=0 // pred_check
    _
  $region3: #{transformer_forward.16} parent=0 // pred_check_branch
    %8 = sbr.rel (0) target = $region5
  $region4: #{transformer_forward.16} parent=0 // pred_region
    _
  $region5: #{transformer_forward.16} parent=0 // pred_fallthru
    _
  // Predicated region
  $region6: #{transformer_forward.16} parent=0 // pred_check
    _
  $region7: #{transformer_forward.16} parent=0 // pred_check_branch
    %10 = sbr.rel (0) target = $region9
  $region8: #{transformer_forward.16} parent=0 // pred_region
    _
  $region9: #{transformer_forward.16} parent=0 // pred_fallthru
    _
  %v11 = vld [vmem:[%s0] sm:$0xf]
  %v12 = vld [vmem:[%s0 + $0x4] sm:$0xf]
  %v13 = vunpack.c.l.bf16 %v11
  %v14 = vunpack.c.l.bf16 %v12
  %v15 = vmul.f32 %v13, %v13
  %v16 = vmul.f32 %v14, %v14
  %vm17 = vcmask 523264
  %v18 = vsel %vm17, %v15, 0.0
  %19 = vadd.xlane.f32.xlu0 %v18
  %v20 = vpop.xlane.xlu0 %19
  %v21 = vsel %vm17, %v16, 0.0
  %22 = vadd.xlane.f32.xlu0 %v21
  %v23 = vpop.xlane.xlu0 %22
  %v24 = vrcp.pop 64.0
  %v25 = vmul.f32 64.0, %v24
  %v26 = vsub.f32 1.0, %v25
  %v27 = vmul.f32 %v24, %v26
  %v28 = vadd.f32 %v24, %v27
  %vm29 = vweird.f32 %v24
  %v30 = vsel %vm29, %v24, %v28
  %v31 = vmul.f32 %v20, %v30
  %v32 = vmul.f32 %v23, %v30
  %v33 = vadd.f32 %v31, 1e-05
  %v34 = vadd.f32 %v32, 1e-05
  %v35 = vrsqrt.pop %v33
  %v36 = vmul.f32 %v35, %v33
  %v37 = vmul.f32 %v36, %v35
  %v38 = vmul.f32 0.5, %v37
  %v39 = vsub.f32 1.5, %v38
  %v40 = vmul.f32 %v35, %v39
  %vm41 = vweird.f32 %v33
  %vm42 = vweird.f32 %v35
  %vm43 = vmor %vm41, %vm42
  %v44 = vsel %vm43, %v35, %v40
  %v45 = vrsqrt.pop %v34
  %v46 = vmul.f32 %v45, %v34
  %v47 = vmul.f32 %v46, %v45
  %v48 = vmul.f32 0.5, %v47
  %v49 = vsub.f32 1.5, %v48
  %v50 = vmul.f32 %v45, %v49
  %vm51 = vweird.f32 %v34
  %vm52 = vweird.f32 %v45
  %vm53 = vmor %vm51, %vm52
  %v54 = vsel %vm53, %v45, %v50
  %v55 = vmul.f32 %v13, %v44
  %v56 = vmul.f32 %v14, %v54
  %v57 = vld [vmem:[%s1] sm:$0x1]
  %v59 = vperm.slane %v57, 0
  %v61 = vmul.f32 %v55, %v59
  %v62 = vmul.f32 %v56, %v59
  %v63 = vpack.c.bf16 %v61, %v61
  %v64 = vpack.c.bf16 %v62, %v62
  %vm65 = vcmask 519168
  %66 = vst.msk [vmem:[%s2] sm:$0xf] %vm65, %v63
  %67 = vst.msk [vmem:[%s2 + $0x4] sm:$0xf] %vm65, %v64
  // Predicated region
  $region10: #{transformer_forward.16} parent=0 // pred_check
    _
  $region11: #{transformer_forward.16} parent=0 // pred_check_branch
    %69 = sbr.rel (0) target = $region13
  $region12: #{transformer_forward.16} parent=0 // pred_region
    _
  $region13: #{transformer_forward.16} parent=0 // pred_fallthru
    _
  // Predicated region
  $region14: #{transformer_forward.16} parent=0 // pred_check
    _
  $region15: #{transformer_forward.16} parent=0 // pred_check_branch
    %71 = sbr.rel (0) target = $region17
  $region16: #{transformer_forward.16} parent=0 // pred_region
    _
  $region17: #{transformer_forward.16} parent=0 // pred_fallthru
    _

// kernel: transformer_forward.17
$region0: #{transformer_forward.17}
  #allocation0 [shape = 'u32[]', space=smem, size = 0x4, offset = 0x4, fixed_abs, tag = 'smem constant byte address 0x4 - core index']
  #allocation1 [shape = 'u32[72,128]{1,0:T(1,128)}', space=vmem, size = 0x9000, scoped, tag = 'internal scratch']
  #allocation2 [shape = 'f32[16,128]{1,0:T(8,128)}', space=vmem, size = 0x2000, scoped, tag = 'scratch operand']
  %s0 = inlined_call_operand.vmem [shape: bf16[16,64], index: 0, kind: input, shape index: {}]
  %s1 = inlined_call_operand.vmem [shape: bf16[64,128], index: 1, kind: input, shape index: {}]
  %s2 = inlined_call_operand.vmem [shape: bf16[16,128], index: 2, kind: output, shape index: {}]
  %s3 = sld [smem:[#allocation0]]
  $region26: #{transformer_forward.17} parent=0
    _
  %s5 = ssub.s32 1, %s3
  %s6 = scalar_select 0, %s5, %s3
  // Predicated region
  $region2: #{transformer_forward.17} parent=0 // pred_check
    _
  $region3: #{transformer_forward.17} parent=0 // pred_check_branch
    %8 = sbr.rel (0) target = $region5
  $region4: #{transformer_forward.17} parent=0 // pred_region
    _
  $region5: #{transformer_forward.17} parent=0 // pred_fallthru
    _
  // Predicated region
  $region6: #{transformer_forward.17} parent=0 // pred_check
    _
  $region7: #{transformer_forward.17} parent=0 // pred_check_branch
    %10 = sbr.rel (0) target = $region9
  $region8: #{transformer_forward.17} parent=0 // pred_region
    _
  $region9: #{transformer_forward.17} parent=0 // pred_fallthru
    _
  %p12 = scmp.eq.s32.totalorder 0, 0
  // Predicated region
  $region10: #{transformer_forward.17} parent=0 // pred_check
    %p13 = pneg %p12
  $region11: #{transformer_forward.17} parent=0 // pred_check_branch
    %15 = sbr.rel (%p13) target = $region13
  $region12: #{transformer_forward.17} parent=0 // pred_region
    %16 = vst [vmem:[#allocation2] sm:$0xff] 0.0
    %17 = vst [vmem:[#allocation2 + $0x8] sm:$0xff] 0.0
  $region13: #{transformer_forward.17} parent=0 // pred_fallthru
    _
  %v18 = vld [vmem:[#allocation2] sm:$0xff]
  %v19 = vld [vmem:[#allocation2 + $0x8] sm:$0xff]
  %v20 = vld [vmem:[%s0] sm:$0xf]
  %v21 = vld [vmem:[%s0 + $0x4] sm:$0xf]
  %v22 = vld [vmem:[%s1] sm:$0xf]
  %v23 = vld [vmem:[%s1 + $0x4] sm:$0xf]
  %v24 = vld [vmem:[%s1 + $0x8] sm:$0xf]
  %v25 = vld [vmem:[%s1 + $0xc] sm:$0xf]
  %v26 = vld [vmem:[%s1 + $0x10] sm:$0xf]
  %v27 = vld [vmem:[%s1 + $0x14] sm:$0xf]
  %v28 = vld [vmem:[%s1 + $0x18] sm:$0xf]
  %v29 = vld [vmem:[%s1 + $0x1c] sm:$0xf]
  %v32 = vunpack.c.l.b16 %v20
  %v33 = vunpack.c.l.b16 %v21
  %v34 = vpack.c.b16 %v33, %v32
  %v43 = vunpack.c.l.b16 %v22
  %v44 = vunpack.c.l.b16 %v23
  %v45 = vunpack.c.l.b16 %v24
  %v46 = vunpack.c.l.b16 %v25
  %v47 = vunpack.c.l.b16 %v26
  %v48 = vunpack.c.l.b16 %v27
  %v49 = vunpack.c.l.b16 %v28
  %v50 = vunpack.c.l.b16 %v29
  %v51 = vpack.c.b16 %v44, %v43
  %v52 = vpack.c.b16 %v46, %v45
  %v53 = vpack.c.b16 %v48, %v47
  %v54 = vpack.c.b16 %v50, %v49
  %vm59 = vcmask 523264
  %v61 = vsel %vm59, %v34, 0
  %63 = vmatpush.bf16.msra.mxu0 0
  %64 = vmatpush.bf16.msra.mxu0 0
  %65 = vmatpush.bf16.msra.mxu0 0
  %66 = vmatpush.bf16.msra.mxu0 0
  %67 = vmatpush.bf16.msra.mxu0 %v54
  %68 = vmatpush.bf16.msra.mxu0 %v53
  %69 = vmatpush.bf16.msra.mxu0 %v52
  %70 = vmatpush.bf16.msra.mxu0 %v51
  %71 = vmatmul.bf16.gmra.mxu0 %v61
  %v72 = vpop.f32.mrf.mxu0
  %v73 = vadd.f32 0.0, %v72
  %v74 = vpop.f32.mrf.mxu0
  %v75 = vadd.f32 0.0, %v74
  %76 = vdwg.mxu0
  %v77 = vadd.f32 %v18, %v73
  %v78 = vadd.f32 %v19, %v75
  %79 = vst [vmem:[#allocation2] sm:$0xff] %v77
  %80 = vst [vmem:[#allocation2 + $0x8] sm:$0xff] %v78
  // Predicated region
  $region14: #{transformer_forward.17} parent=0 // pred_check
    %p81 = pneg %p12
  $region15: #{transformer_forward.17} parent=0 // pred_check_branch
    %83 = sbr.rel (%p81) target = $region17
  $region16: #{transformer_forward.17} parent=0 // pred_region
    %v84 = vld [vmem:[#allocation2] sm:$0xff]
    %v85 = vld [vmem:[#allocation2 + $0x8] sm:$0xff]
    %v86 = vpack.c.bf16 %v84, %v84
    %v87 = vpack.c.bf16 %v85, %v85
    %88 = vst [vmem:[%s2] sm:$0xf] %v86
    %89 = vst [vmem:[%s2 + $0x4] sm:$0xf] %v87
  $region17: #{transformer_forward.17} parent=0 // pred_fallthru
    _
  // Predicated region
  $region18: #{transformer_forward.17} parent=0 // pred_check
    _
  $region19: #{transformer_forward.17} parent=0 // pred_check_branch
    %91 = sbr.rel (0) target = $region21
  $region20: #{transformer_forward.17} parent=0 // pred_region
    _
  $region21: #{transformer_forward.17} parent=0 // pred_fallthru
    _
  // Predicated region
  $region22: #{transformer_forward.17} parent=0 // pred_check
    _
  $region23: #{transformer_forward.17} parent=0 // pred_check_branch
    %93 = sbr.rel (0) target = $region25
  $region24: #{transformer_forward.17} parent=0 // pred_region
    _
  $region25: #{transformer_forward.17} parent=0 // pred_fallthru
    _

// kernel: transformer_forward.21
$region0: #{transformer_forward.21}
  #allocation0 [shape = 'u32[]', space=smem, size = 0x4, offset = 0x4, fixed_abs, tag = 'smem constant byte address 0x4 - core index']
  #allocation1 [shape = 'u32[72,128]{1,0:T(1,128)}', space=vmem, size = 0x9000, scoped, tag = 'internal scratch']
  #allocation2 [shape = 'f32[16,192]{1,0:T(8,128)}', space=vmem, size = 0x4000, scoped, tag = 'scratch operand']
  #allocation3 [shape = 'f32[16,192]{1,0:T(8,128)}', space=vmem, size = 0x4000, scoped, tag = 'scratch operand']
  %s0 = inlined_call_operand.vmem [shape: bf16[16,64], index: 0, kind: input, shape index: {}]
  %s1 = inlined_call_operand.vmem [shape: bf16[64,192], index: 1, kind: input, shape index: {}]
  %s2 = inlined_call_operand.vmem [shape: bf16[64,192], index: 2, kind: input, shape index: {}]
  %s3 = inlined_call_operand.vmem [shape: bf16[16,192], index: 3, kind: output, shape index: {}]
  %s4 = sld [smem:[#allocation0]]
  $region30: #{transformer_forward.21} parent=0
    _
  %s6 = ssub.s32 1, %s4
  %s7 = scalar_select 0, %s6, %s4
  // Predicated region
  $region2: #{transformer_forward.21} parent=0 // pred_check
    _
  $region3: #{transformer_forward.21} parent=0 // pred_check_branch
    %9 = sbr.rel (0) target = $region5
  $region4: #{transformer_forward.21} parent=0 // pred_region
    _
  $region5: #{transformer_forward.21} parent=0 // pred_fallthru
    _
  // Predicated region
  $region6: #{transformer_forward.21} parent=0 // pred_check
    _
  $region7: #{transformer_forward.21} parent=0 // pred_check_branch
    %11 = sbr.rel (0) target = $region9
  $region8: #{transformer_forward.21} parent=0 // pred_region
    _
  $region9: #{transformer_forward.21} parent=0 // pred_fallthru
    _
  // Predicated region
  $region10: #{transformer_forward.21} parent=0 // pred_check
    _
  $region11: #{transformer_forward.21} parent=0 // pred_check_branch
    %13 = sbr.rel (0) target = $region13
  $region12: #{transformer_forward.21} parent=0 // pred_region
    _
  $region13: #{transformer_forward.21} parent=0 // pred_fallthru
    _
  %p15 = scmp.eq.s32.totalorder 0, 0
  // Predicated region
  $region14: #{transformer_forward.21} parent=0 // pred_check
    %p16 = pneg %p15
  $region15: #{transformer_forward.21} parent=0 // pred_check_branch
    %18 = sbr.rel (%p16) target = $region17
  $region16: #{transformer_forward.21} parent=0 // pred_region
    %19 = vst [vmem:[#allocation2] sm:$0xff] 0.0
    %vm20 = vcmask 523264
    %21 = vst.msk [vmem:[#allocation2 + $0x8] sm:$0xff] %vm20, 0.0
    %22 = vst [vmem:[#allocation2 + $0x10] sm:$0xff] 0.0
    %23 = vst.msk [vmem:[#allocation2 + $0x18] sm:$0xff] %vm20, 0.0
    %24 = vst [vmem:[#allocation3] sm:$0xff] 0.0
    %25 = vst.msk [vmem:[#allocation3 + $0x8] sm:$0xff] %vm20, 0.0
    %26 = vst [vmem:[#allocation3 + $0x10] sm:$0xff] 0.0
    %27 = vst.msk [vmem:[#allocation3 + $0x18] sm:$0xff] %vm20, 0.0
  $region17: #{transformer_forward.21} parent=0 // pred_fallthru
    _
  %v28 = vld [vmem:[%s0] sm:$0xf]
  %v29 = vld [vmem:[%s0 + $0x4] sm:$0xf]
  %v30 = vld [vmem:[#allocation2] sm:$0xff]
  %v31 = vld [vmem:[#allocation2 + $0x8] sm:$0xff]
  %v32 = vld [vmem:[#allocation2 + $0x10] sm:$0xff]
  %v33 = vld [vmem:[#allocation2 + $0x18] sm:$0xff]
  %v34 = vld [vmem:[%s1] sm:$0xff]
  %v35 = vld [vmem:[%s1 + $0x8] sm:$0xff]
  %v36 = vld [vmem:[%s1 + $0x10] sm:$0xff]
  %v37 = vld [vmem:[%s1 + $0x18] sm:$0xff]
  %v38 = vld [vmem:[%s1 + $0x20] sm:$0xff]
  %v39 = vld [vmem:[%s1 + $0x28] sm:$0xff]
  %v40 = vld [vmem:[%s1 + $0x30] sm:$0xff]
  %v41 = vld [vmem:[%s1 + $0x38] sm:$0xff]
  %v44 = vunpack.c.l.b16 %v28
  %v45 = vunpack.c.l.b16 %v29
  %v46 = vpack.c.b16 %v45, %v44
  %v55 = vunpack.c.l.b16 %v34
  %v56 = vunpack.c.h.b16 %v34
  %v57 = vunpack.c.l.b16 %v35
  %v58 = vunpack.c.h.b16 %v35
  %v59 = vunpack.c.l.b16 %v36
  %v60 = vunpack.c.h.b16 %v36
  %v61 = vunpack.c.l.b16 %v37
  %v62 = vunpack.c.h.b16 %v37
  %v63 = vunpack.c.l.b16 %v38
  %v64 = vunpack.c.h.b16 %v38
  %v65 = vunpack.c.l.b16 %v39
  %v66 = vunpack.c.h.b16 %v39
  %v67 = vunpack.c.l.b16 %v40
  %v68 = vunpack.c.h.b16 %v40
  %v69 = vunpack.c.l.b16 %v41
  %v70 = vunpack.c.h.b16 %v41
  %v71 = vpack.c.b16 %v57, %v55
  %v72 = vpack.c.b16 %v58, %v56
  %v73 = vpack.c.b16 %v61, %v59
  %v74 = vpack.c.b16 %v62, %v60
  %v75 = vpack.c.b16 %v65, %v63
  %v76 = vpack.c.b16 %v66, %v64
  %v77 = vpack.c.b16 %v69, %v67
  %v78 = vpack.c.b16 %v70, %v68
  %vm87 = vcmask 523264
  %v89 = vsel %vm87, %v46, 0
  %91 = vmatpush.bf16.msra.mxu0 0
  %92 = vmatpush.bf16.msra.mxu0 0
  %93 = vmatpush.bf16.msra.mxu0 0
  %94 = vmatpush.bf16.msra.mxu0 0
  %95 = vmatpush.bf16.msra.mxu0 %v77
  %96 = vmatpush.bf16.msra.mxu0 %v75
  %97 = vmatpush.bf16.msra.mxu0 %v73
  %98 = vmatpush.bf16.msra.mxu0 %v71
  %99 = vmatmul.bf16.gmra.mxu0 %v89
  %v100 = vpop.f32.mrf.mxu0
  %v101 = vadd.f32 0.0, %v100
  %v102 = vpop.f32.mrf.mxu0
  %v103 = vadd.f32 0.0, %v102
  %104 = vdwg.mxu0
  %105 = vmatpush.bf16.msra.mxu0 0
  %106 = vmatpush.bf16.msra.mxu0 0
  %107 = vmatpush.bf16.msra.mxu0 0
  %108 = vmatpush.bf16.msra.mxu0 0
  %109 = vmatpush.bf16.msra.mxu0 %v78
  %110 = vmatpush.bf16.msra.mxu0 %v76
  %111 = vmatpush.bf16.msra.mxu0 %v74
  %112 = vmatpush.bf16.msra.mxu0 %v72
  %113 = vmatmul.bf16.gmra.mxu0 %v89
  %v114 = vpop.f32.mrf.mxu0
  %v115 = vadd.f32 0.0, %v114
  %v116 = vpop.f32.mrf.mxu0
  %v117 = vadd.f32 0.0, %v116
  %118 = vdwg.mxu0
  %v119 = vadd.f32 %v30, %v101
  %v120 = vadd.f32 %v31, %v115
  %v121 = vadd.f32 %v32, %v103
  %v122 = vadd.f32 %v33, %v117
  %123 = vst [vmem:[#allocation2] sm:$0xff] %v119
  %124 = vst.msk [vmem:[#allocation2 + $0x8] sm:$0xff] %vm87, %v120
  %125 = vst [vmem:[#allocation2 + $0x10] sm:$0xff] %v121
  %126 = vst.msk [vmem:[#allocation2 + $0x18] sm:$0xff] %vm87, %v122
  %v127 = vld [vmem:[#allocation3] sm:$0xff]
  %v128 = vld [vmem:[#allocation3 + $0x8] sm:$0xff]
  %v129 = vld [vmem:[#allocation3 + $0x10] sm:$0xff]
  %v130 = vld [vmem:[#allocation3 + $0x18] sm:$0xff]
  %v131 = vld [vmem:[%s2] sm:$0xff]
  %v132 = vld [vmem:[%s2 + $0x8] sm:$0xff]
  %v133 = vld [vmem:[%s2 + $0x10] sm:$0xff]
  %v134 = vld [vmem:[%s2 + $0x18] sm:$0xff]
  %v135 = vld [vmem:[%s2 + $0x20] sm:$0xff]
  %v136 = vld [vmem:[%s2 + $0x28] sm:$0xff]
  %v137 = vld [vmem:[%s2 + $0x30] sm:$0xff]
  %v138 = vld [vmem:[%s2 + $0x38] sm:$0xff]
  %v147 = vunpack.c.l.b16 %v131
  %v148 = vunpack.c.h.b16 %v131
  %v149 = vunpack.c.l.b16 %v132
  %v150 = vunpack.c.h.b16 %v132
  %v151 = vunpack.c.l.b16 %v133
  %v152 = vunpack.c.h.b16 %v133
  %v153 = vunpack.c.l.b16 %v134
  %v154 = vunpack.c.h.b16 %v134
  %v155 = vunpack.c.l.b16 %v135
  %v156 = vunpack.c.h.b16 %v135
  %v157 = vunpack.c.l.b16 %v136
  %v158 = vunpack.c.h.b16 %v136
  %v159 = vunpack.c.l.b16 %v137
  %v160 = vunpack.c.h.b16 %v137
  %v161 = vunpack.c.l.b16 %v138
  %v162 = vunpack.c.h.b16 %v138
  %v163 = vpack.c.b16 %v149, %v147
  %v164 = vpack.c.b16 %v150, %v148
  %v165 = vpack.c.b16 %v153, %v151
  %v166 = vpack.c.b16 %v154, %v152
  %v167 = vpack.c.b16 %v157, %v155
  %v168 = vpack.c.b16 %v158, %v156
  %v169 = vpack.c.b16 %v161, %v159
  %v170 = vpack.c.b16 %v162, %v160
  %179 = vmatpush.bf16.msra.mxu0 0
  %180 = vmatpush.bf16.msra.mxu0 0
  %181 = vmatpush.bf16.msra.mxu0 0
  %182 = vmatpush.bf16.msra.mxu0 0
  %183 = vmatpush.bf16.msra.mxu0 %v169
  %184 = vmatpush.bf16.msra.mxu0 %v167
  %185 = vmatpush.bf16.msra.mxu0 %v165
  %186 = vmatpush.bf16.msra.mxu0 %v163
  %187 = vmatmul.bf16.gmra.mxu0 %v89
  %v188 = vpop.f32.mrf.mxu0
  %v189 = vadd.f32 0.0, %v188
  %v190 = vpop.f32.mrf.mxu0
  %v191 = vadd.f32 0.0, %v190
  %192 = vdwg.mxu0
  %193 = vmatpush.bf16.msra.mxu0 0
  %194 = vmatpush.bf16.msra.mxu0 0
  %195 = vmatpush.bf16.msra.mxu0 0
  %196 = vmatpush.bf16.msra.mxu0 0
  %197 = vmatpush.bf16.msra.mxu0 %v170
  %198 = vmatpush.bf16.msra.mxu0 %v168
  %199 = vmatpush.bf16.msra.mxu0 %v166
  %200 = vmatpush.bf16.msra.mxu0 %v164
  %201 = vmatmul.bf16.gmra.mxu0 %v89
  %v202 = vpop.f32.mrf.mxu0
  %v203 = vadd.f32 0.0, %v202
  %v204 = vpop.f32.mrf.mxu0
  %v205 = vadd.f32 0.0, %v204
  %206 = vdwg.mxu0
  %v207 = vadd.f32 %v127, %v189
  %v208 = vadd.f32 %v128, %v203
  %v209 = vadd.f32 %v129, %v191
  %v210 = vadd.f32 %v130, %v205
  %211 = vst [vmem:[#allocation3] sm:$0xff] %v207
  %212 = vst.msk [vmem:[#allocation3 + $0x8] sm:$0xff] %vm87, %v208
  %213 = vst [vmem:[#allocation3 + $0x10] sm:$0xff] %v209
  %214 = vst.msk [vmem:[#allocation3 + $0x18] sm:$0xff] %vm87, %v210
  // Predicated region
  $region18: #{transformer_forward.21} parent=0 // pred_check
    %p215 = pneg %p15
  $region19: #{transformer_forward.21} parent=0 // pred_check_branch
    %217 = sbr.rel (%p215) target = $region21
  $region20: #{transformer_forward.21} parent=0 // pred_region
    %v218 = vld [vmem:[#allocation2] sm:$0xff]
    %v219 = vld [vmem:[#allocation2 + $0x8] sm:$0xff]
    %v220 = vld [vmem:[#allocation2 + $0x10] sm:$0xff]
    %v221 = vld [vmem:[#allocation2 + $0x18] sm:$0xff]
    %v222 = vxor.u32 %v218, 2147483648
    %v223 = vxor.u32 %v219, 2147483648
    %v224 = vxor.u32 %v220, 2147483648
    %v225 = vxor.u32 %v221, 2147483648
    %v226 = vmul.f32 %v222, 1.442695
    %v227 = vpow.pop %v226
    %v228 = vmul.f32 %v223, 1.442695
    %v229 = vpow.pop %v228
    %v230 = vmul.f32 %v224, 1.442695
    %v231 = vpow.pop %v230
    %v232 = vmul.f32 %v225, 1.442695
    %v233 = vpow.pop %v232
    %v234 = vadd.f32 %v227, 1.0
    %v235 = vadd.f32 %v229, 1.0
    %v236 = vadd.f32 %v231, 1.0
    %v237 = vadd.f32 %v233, 1.0
    %v238 = vrcp.pop %v234
    %v239 = vmul.f32 %v234, %v238
    %v240 = vsub.f32 1.0, %v239
    %v241 = vmul.f32 %v238, %v240
    %v242 = vadd.f32 %v238, %v241
    %vm243 = vweird.f32 %v234
    %vm244 = vweird.f32 %v238
    %vm245 = vmor %vm243, %vm244
    %v246 = vsel %vm245, %v238, %v242
    %v247 = vand.u32 2147483647, %v234
    %vm248 = vcmp.eq.f32.partialorder %v247, 8.507059e+37
    %v249 = vand.u32 %v234, 2147483648
    %v250 = vor.u32 1.1754944e-38, %v249
    %v251 = vsel %vm248, %v250, %v246
    %v252 = vmul.f32 1.0, %v251
    %v253 = vrcp.pop %v235
    %v254 = vmul.f32 %v235, %v253
    %v255 = vsub.f32 1.0, %v254
    %v256 = vmul.f32 %v253, %v255
    %v257 = vadd.f32 %v253, %v256
    %vm258 = vweird.f32 %v235
    %vm259 = vweird.f32 %v253
    %vm260 = vmor %vm258, %vm259
    %v261 = vsel %vm260, %v253, %v257
    %v262 = vand.u32 2147483647, %v235
    %vm263 = vcmp.eq.f32.partialorder %v262, 8.507059e+37
    %v264 = vand.u32 %v235, 2147483648
    %v265 = vor.u32 1.1754944e-38, %v264
    %v266 = vsel %vm263, %v265, %v261
    %v267 = vmul.f32 1.0, %v266
    %v268 = vrcp.pop %v236
    %v269 = vmul.f32 %v236, %v268
    %v270 = vsub.f32 1.0, %v269
    %v271 = vmul.f32 %v268, %v270
    %v272 = vadd.f32 %v268, %v271
    %vm273 = vweird.f32 %v236
    %vm274 = vweird.f32 %v268
    %vm275 = vmor %vm273, %vm274
    %v276 = vsel %vm275, %v268, %v272
    %v277 = vand.u32 2147483647, %v236
    %vm278 = vcmp.eq.f32.partialorder %v277, 8.507059e+37
    %v279 = vand.u32 %v236, 2147483648
    %v280 = vor.u32 1.1754944e-38, %v279
    %v281 = vsel %vm278, %v280, %v276
    %v282 = vmul.f32 1.0, %v281
    %v283 = vrcp.pop %v237
    %v284 = vmul.f32 %v237, %v283
    %v285 = vsub.f32 1.0, %v284
    %v286 = vmul.f32 %v283, %v285
    %v287 = vadd.f32 %v283, %v286
    %vm288 = vweird.f32 %v237
    %vm289 = vweird.f32 %v283
    %vm290 = vmor %vm288, %vm289
    %v291 = vsel %vm290, %v283, %v287
    %v292 = vand.u32 2147483647, %v237
    %vm293 = vcmp.eq.f32.partialorder %v292, 8.507059e+37
    %v294 = vand.u32 %v237, 2147483648
    %v295 = vor.u32 1.1754944e-38, %v294
    %v296 = vsel %vm293, %v295, %v291
    %v297 = vmul.f32 1.0, %v296
    %v298 = vmul.f32 %v218, %v252
    %v299 = vmul.f32 %v219, %v267
    %v300 = vmul.f32 %v220, %v282
    %v301 = vmul.f32 %v221, %v297
    %v302 = vld [vmem:[#allocation3] sm:$0xff]
    %v303 = vld [vmem:[#allocation3 + $0x8] sm:$0xff]
    %v304 = vld [vmem:[#allocation3 + $0x10] sm:$0xff]
    %v305 = vld [vmem:[#allocation3 + $0x18] sm:$0xff]
    %v306 = vmul.f32 %v298, %v302
    %v307 = vmul.f32 %v299, %v303
    %v308 = vmul.f32 %v300, %v304
    %v309 = vmul.f32 %v301, %v305
    %v310 = vpack.c.bf16 %v307, %v306
    %v311 = vpack.c.bf16 %v309, %v308
    %vm312 = vcmask 1043456
    %vm313 = vcmask 523268
    %vm314 = vmor %vm313, %vm312
    %315 = vst.msk [vmem:[%s3] sm:$0xff] %vm314, %v310
    %316 = vst.msk [vmem:[%s3 + $0x8] sm:$0xff] %vm314, %v311
  $region21: #{transformer_forward.21} parent=0 // pred_fallthru
    _
  // Predicated region
  $region22: #{transformer_forward.21} parent=0 // pred_check
    _
  $region23: #{transformer_forward.21} parent=0 // pred_check_branch
    %318 = sbr.rel (0) target = $region25
  $region24: #{transformer_forward.21} parent=0 // pred_region
    _
  $region25: #{transformer_forward.21} parent=0 // pred_fallthru
    _
  // Predicated region
  $region26: #{transformer_forward.21} parent=0 // pred_check
    _
  $region27: #{transformer_forward.21} parent=0 // pred_check_branch
    %320 = sbr.rel (0) target = $region29
  $region28: #{transformer_forward.21} parent=0 // pred_region
    _
  $region29: #{transformer_forward.21} parent=0 // pred_fallthru
    _

// kernel: transformer_forward.19
$region0: #{transformer_forward.19}
  #allocation0 [shape = 'u32[]', space=smem, size = 0x4, offset = 0x4, fixed_abs, tag = 'smem constant byte address 0x4 - core index']
  #allocation1 [shape = 'u32[72,128]{1,0:T(1,128)}', space=vmem, size = 0x9000, scoped, tag = 'internal scratch']
  #allocation2 [shape = 'f32[16,64]{1,0:T(8,128)}', space=vmem, size = 0x2000, scoped, tag = 'scratch operand']
  %s0 = inlined_call_operand.vmem [shape: bf16[16,64], index: 0, kind: input, shape index: {}]
  %s1 = inlined_call_operand.vmem [shape: bf16[64,64], index: 1, kind: input, shape index: {}]
  %s2 = inlined_call_operand.vmem [shape: bf16[16,64], index: 2, kind: input, shape index: {}]
  %s3 = inlined_call_operand.vmem [shape: bf16[16,64], index: 3, kind: output, shape index: {}]
  %s4 = sld [smem:[#allocation0]]
  $region30: #{transformer_forward.19} parent=0
    _
  %s6 = ssub.s32 1, %s4
  %s7 = scalar_select 0, %s6, %s4
  // Predicated region
  $region2: #{transformer_forward.19} parent=0 // pred_check
    _
  $region3: #{transformer_forward.19} parent=0 // pred_check_branch
    %9 = sbr.rel (0) target = $region5
  $region4: #{transformer_forward.19} parent=0 // pred_region
    _
  $region5: #{transformer_forward.19} parent=0 // pred_fallthru
    _
  // Predicated region
  $region6: #{transformer_forward.19} parent=0 // pred_check
    _
  $region7: #{transformer_forward.19} parent=0 // pred_check_branch
    %11 = sbr.rel (0) target = $region9
  $region8: #{transformer_forward.19} parent=0 // pred_region
    _
  $region9: #{transformer_forward.19} parent=0 // pred_fallthru
    _
  // Predicated region
  $region10: #{transformer_forward.19} parent=0 // pred_check
    _
  $region11: #{transformer_forward.19} parent=0 // pred_check_branch
    %13 = sbr.rel (0) target = $region13
  $region12: #{transformer_forward.19} parent=0 // pred_region
    _
  $region13: #{transformer_forward.19} parent=0 // pred_fallthru
    _
  %p15 = scmp.eq.s32.totalorder 0, 0
  // Predicated region
  $region14: #{transformer_forward.19} parent=0 // pred_check
    %p16 = pneg %p15
  $region15: #{transformer_forward.19} parent=0 // pred_check_branch
    %18 = sbr.rel (%p16) target = $region17
  $region16: #{transformer_forward.19} parent=0 // pred_region
    %vm19 = vcmask 523264
    %20 = vst.msk [vmem:[#allocation2] sm:$0xff] %vm19, 0.0
    %21 = vst.msk [vmem:[#allocation2 + $0x8] sm:$0xff] %vm19, 0.0
  $region17: #{transformer_forward.19} parent=0 // pred_fallthru
    _
  %v22 = vld [vmem:[#allocation2] sm:$0xff]
  %v23 = vld [vmem:[#allocation2 + $0x8] sm:$0xff]
  %v24 = vld [vmem:[%s0] sm:$0xf]
  %v25 = vld [vmem:[%s0 + $0x4] sm:$0xf]
  %v26 = vld [vmem:[%s1] sm:$0xf]
  %v27 = vld [vmem:[%s1 + $0x4] sm:$0xf]
  %v28 = vld [vmem:[%s1 + $0x8] sm:$0xf]
  %v29 = vld [vmem:[%s1 + $0xc] sm:$0xf]
  %v30 = vld [vmem:[%s1 + $0x10] sm:$0xf]
  %v31 = vld [vmem:[%s1 + $0x14] sm:$0xf]
  %v32 = vld [vmem:[%s1 + $0x18] sm:$0xf]
  %v33 = vld [vmem:[%s1 + $0x1c] sm:$0xf]
  %v36 = vunpack.c.l.b16 %v24
  %v37 = vunpack.c.l.b16 %v25
  %v38 = vpack.c.b16 %v37, %v36
  %v47 = vunpack.c.l.b16 %v26
  %v48 = vunpack.c.l.b16 %v27
  %v49 = vunpack.c.l.b16 %v28
  %v50 = vunpack.c.l.b16 %v29
  %v51 = vunpack.c.l.b16 %v30
  %v52 = vunpack.c.l.b16 %v31
  %v53 = vunpack.c.l.b16 %v32
  %v54 = vunpack.c.l.b16 %v33
  %v55 = vpack.c.b16 %v48, %v47
  %v56 = vpack.c.b16 %v50, %v49
  %v57 = vpack.c.b16 %v52, %v51
  %v58 = vpack.c.b16 %v54, %v53
  %vm63 = vcmask 523264
  %v65 = vsel %vm63, %v38, 0
  %67 = vmatpush.bf16.msra.mxu0 0
  %68 = vmatpush.bf16.msra.mxu0 0
  %69 = vmatpush.bf16.msra.mxu0 0
  %70 = vmatpush.bf16.msra.mxu0 0
  %71 = vmatpush.bf16.msra.mxu0 %v58
  %72 = vmatpush.bf16.msra.mxu0 %v57
  %73 = vmatpush.bf16.msra.mxu0 %v56
  %74 = vmatpush.bf16.msra.mxu0 %v55
  %75 = vmatmul.bf16.gmra.mxu0 %v65
  %v76 = vpop.f32.mrf.mxu0
  %v77 = vadd.f32 0.0, %v76
  %v78 = vpop.f32.mrf.mxu0
  %v79 = vadd.f32 0.0, %v78
  %80 = vdwg.mxu0
  %v81 = vadd.f32 %v22, %v77
  %v82 = vadd.f32 %v23, %v79
  %83 = vst.msk [vmem:[#allocation2] sm:$0xff] %vm63, %v81
  %84 = vst.msk [vmem:[#allocation2 + $0x8] sm:$0xff] %vm63, %v82
  // Predicated region
  $region18: #{transformer_forward.19} parent=0 // pred_check
    %p85 = pneg %p15
  $region19: #{transformer_forward.19} parent=0 // pred_check_branch
    %87 = sbr.rel (%p85) target = $region21
  $region20: #{transformer_forward.19} parent=0 // pred_region
    %v88 = vld [vmem:[#allocation2] sm:$0xff]
    %v89 = vld [vmem:[#allocation2 + $0x8] sm:$0xff]
    %v90 = vld [vmem:[%s2] sm:$0xf]
    %v91 = vld [vmem:[%s2 + $0x4] sm:$0xf]
    %v92 = vunpack.c.l.bf16 %v90
    %v93 = vunpack.c.l.bf16 %v91
    %v94 = vadd.f32 %v88, %v92
    %v95 = vadd.f32 %v89, %v93
    %v96 = vpack.c.bf16 %v94, %v94
    %v97 = vpack.c.bf16 %v95, %v95
    %vm98 = vcmask 519168
    %99 = vst.msk [vmem:[%s3] sm:$0xf] %vm98, %v96
    %100 = vst.msk [vmem:[%s3 + $0x4] sm:$0xf] %vm98, %v97
  $region21: #{transformer_forward.19} parent=0 // pred_fallthru
    _
  // Predicated region
  $region22: #{transformer_forward.19} parent=0 // pred_check
    _
  $region23: #{transformer_forward.19} parent=0 // pred_check_branch
    %102 = sbr.rel (0) target = $region25
  $region24: #{transformer_forward.19} parent=0 // pred_region
    _
  $region25: #{transformer_forward.19} parent=0 // pred_fallthru
    _
  // Predicated region
  $region26: #{transformer_forward.19} parent=0 // pred_check
    _
  $region27: #{transformer_forward.19} parent=0 // pred_check_branch
    %104 = sbr.rel (0) target = $region29
  $region28: #{transformer_forward.19} parent=0 // pred_region
    _
  $region29: #{transformer_forward.19} parent=0 // pred_fallthru
    _

// kernel: transformer_forward.18
$region0: #{transformer_forward.18}
  #allocation0 [shape = 'u32[]', space=smem, size = 0x4, offset = 0x4, fixed_abs, tag = 'smem constant byte address 0x4 - core index']
  #allocation1 [shape = 'u32[72,128]{1,0:T(1,128)}', space=vmem, size = 0x9000, scoped, tag = 'internal scratch']
  #allocation2 [shape = 'f32[16,1]{1,0:T(8,128)}', space=vmem, size = 0x2000, scoped, tag = 'scratch operand']
  #allocation3 [shape = 'f32[16,1]{1,0:T(8,128)}', space=vmem, size = 0x2000, scoped, tag = 'scratch operand']
  #allocation4 [shape = 'f32[16,16]{1,0:T(8,128)}', space=vmem, size = 0x2000, scoped, tag = 'scratch operand']
  %s0 = inlined_call_operand.vmem [shape: bf16[2,2,2,8,16], index: 0, kind: input, shape index: {}]
  %s1 = inlined_call_operand.vmem [shape: bf16[4,2,16,16], index: 1, kind: input, shape index: {}]
  %s2 = inlined_call_operand.vmem [shape: bf16[4,2,16,16], index: 2, kind: input, shape index: {}]
  %s3 = inlined_call_operand.vmem [shape: bf16[2,8,2,2,16], index: 3, kind: output, shape index: {}]
  %s4 = sld [smem:[#allocation0]]
  $region102: #{transformer_forward.18} parent=0
    _
  %s6 = ssub.s32 1, %s4
  %s7 = scalar_select 0, %s6, %s4
  $region1: #{transformer_forward.18} parent=0
    #allocation5 [shape = 'u8[8192]{0}', space=vmem, size = 0x2000, scoped, tag = 'output window, operand 0']
    loop: start=0, step=1, limit=6
    $region2: #{transformer_forward.18} parent=1 // loop_pre_header
      _
    $region3: #{transformer_forward.18} parent=1 // loop_header
      %s9 = sphi 0, %s13
      %p10 = scmp.ge.s32.totalorder %s9, 6
      %s16 = sphi 0, %s42
      %s17 = sphi 0, %s38
      %s18 = sphi 0, %s34
      %s19 = sphi 0, %s30
      %s20 = sphi 0, %s16
      %s21 = sphi 0, %s17
      %s22 = sphi 0, %s18
      %s23 = sphi 0, %s19
      %s24 = sphi 0, %s20
      %s25 = sphi 0, %s21
      %s26 = sphi 0, %s22
      %s27 = sphi 0, %s23
      %s49 = sphi 0, %s51
      %s52 = sphi 0, %s49
      %s53 = sphi 0, %s52
      %s69 = sphi 0, %s53
      %s79 = sphi 0, %s81
      %s82 = sphi 0, %s79
      %s83 = sphi 0, %s82
      %s99 = sphi 0, %s83
      %s109 = sphi 0, %s111
      %s112 = sphi 0, %s109
      %s113 = sphi 0, %s112
      %s129 = sphi 0, %s113
      %s139 = sphi 0, %s141
      %s142 = sphi 0, %s139
      %s143 = sphi 0, %s142
      %s159 = sphi 0, %s143
    $region4: #{transformer_forward.18} parent=1 // loop_header_branch
      %12 = sbr.rel (%p10) target = $region8
    $region5: #{transformer_forward.18} parent=1 // loop_body
      %s14 = ssub.s32 %s9, 1
      %s15 = ssub.s32 %s9, 2
      %s28 = sadd.s32 1, %s19
      %p29 = scmp.ge.s32.totalorder %s28, 1
      %s30 = scalar_select %p29, 0, %s28
      %s31 = sadd.s32 1, %s18
      %s32 = scalar_select %p29, %s31, %s18
      %p33 = scmp.ge.s32.totalorder %s32, 1
      %s34 = scalar_select %p33, 0, %s32
      %s35 = sadd.s32 1, %s17
      %s36 = scalar_select %p33, %s35, %s17
      %p37 = scmp.ge.s32.totalorder %s36, 2
      %s38 = scalar_select %p37, 0, %s36
      %s39 = sadd.s32 1, %s16
      %s40 = scalar_select %p37, %s39, %s16
      %p41 = scmp.ge.s32.totalorder %s40, 2
      %s42 = scalar_select %p41, 0, %s40
      %s43 = ssub.s32 %s16, %s42
      %s44 = ssub.s32 %s17, %s38
      %s45 = sor.u32 %s43, %s44
      %s46 = ssub.s32 %s18, %s34
      %s47 = sor.u32 %s45, %s46
      %p48 = scmp.eq.s32.totalorder %s47, 0
      %s50 = sadd.s32 %s49, 1
      %s51 = scalar_select %p48, %s49, %s50
      %p54 = pneg %p48
      %p55 = scmp.eq.s32.totalorder %s9, 3
      %p56 = por %p54, %p55
      %p57 = scmp.ne.s32.totalorder %s49, %s52
      %p58 = scmp.eq.s32.totalorder %s9, 0
      %p59 = por %p57, %p58
      %p60 = scmp.ne.s32.totalorder %s49, %s52
      %p61 = scmp.eq.s32.totalorder %s14, 3
      %p62 = por %p60, %p61
      %p63 = scmp.ne.s32.totalorder %s52, %s53
      %p64 = scmp.eq.s32.totalorder %s14, 0
      %p65 = por %p63, %p64
      %p66 = scmp.ne.s32.totalorder %s52, %s53
      %p67 = scmp.eq.s32.totalorder %s15, 3
      %p68 = por %p66, %p67
      %p70 = scmp.ne.s32.totalorder %s53, %s69
      %p71 = scmp.eq.s32.totalorder %s15, 0
      %p72 = por %p70, %p71
      %s73 = ssub.s32 %s16, %s42
      %s74 = ssub.s32 %s17, %s38
      %s75 = sor.u32 %s73, %s74
      %s76 = ssub.s32 %s19, %s30
      %s77 = sor.u32 %s75, %s76
      %p78 = scmp.eq.s32.totalorder %s77, 0
      %s80 = sadd.s32 %s79, 1
      %s81 = scalar_select %p78, %s79, %s80
      %p84 = pneg %p78
      %p85 = scmp.eq.s32.totalorder %s9, 3
      %p86 = por %p84, %p85
      %p87 = scmp.ne.s32.totalorder %s79, %s82
      %p88 = scmp.eq.s32.totalorder %s9, 0
      %p89 = por %p87, %p88
      %p90 = scmp.ne.s32.totalorder %s79, %s82
      %p91 = scmp.eq.s32.totalorder %s14, 3
      %p92 = por %p90, %p91
      %p93 = scmp.ne.s32.totalorder %s82, %s83
      %p94 = scmp.eq.s32.totalorder %s14, 0
      %p95 = por %p93, %p94
      %p96 = scmp.ne.s32.totalorder %s82, %s83
      %p97 = scmp.eq.s32.totalorder %s15, 3
      %p98 = por %p96, %p97
      %p100 = scmp.ne.s32.totalorder %s83, %s99
      %p101 = scmp.eq.s32.totalorder %s15, 0
      %p102 = por %p100, %p101
      %s103 = ssub.s32 %s16, %s42
      %s104 = ssub.s32 %s17, %s38
      %s105 = sor.u32 %s103, %s104
      %s106 = ssub.s32 %s19, %s30
      %s107 = sor.u32 %s105, %s106
      %p108 = scmp.eq.s32.totalorder %s107, 0
      %s110 = sadd.s32 %s109, 1
      %s111 = scalar_select %p108, %s109, %s110
      %p114 = pneg %p108
      %p115 = scmp.eq.s32.totalorder %s9, 3
      %p116 = por %p114, %p115
      %p117 = scmp.ne.s32.totalorder %s109, %s112
      %p118 = scmp.eq.s32.totalorder %s9, 0
      %p119 = por %p117, %p118
      %p120 = scmp.ne.s32.totalorder %s109, %s112
      %p121 = scmp.eq.s32.totalorder %s14, 3
      %p122 = por %p120, %p121
      %p123 = scmp.ne.s32.totalorder %s112, %s113
      %p124 = scmp.eq.s32.totalorder %s14, 0
      %p125 = por %p123, %p124
      %p126 = scmp.ne.s32.totalorder %s112, %s113
      %p127 = scmp.eq.s32.totalorder %s15, 3
      %p128 = por %p126, %p127
      %p130 = scmp.ne.s32.totalorder %s113, %s129
      %p131 = scmp.eq.s32.totalorder %s15, 0
      %p132 = por %p130, %p131
      %s133 = ssub.s32 %s16, %s42
      %s134 = ssub.s32 %s18, %s34
      %s135 = sor.u32 %s133, %s134
      %s136 = ssub.s32 %s17, %s38
      %s137 = sor.u32 %s135, %s136
      %p138 = scmp.eq.s32.totalorder %s137, 0
      %s140 = sadd.s32 %s139, 1
      %s141 = scalar_select %p138, %s139, %s140
      %p144 = pneg %p138
      %p145 = scmp.eq.s32.totalorder %s9, 3
      %p146 = por %p144, %p145
      %p147 = scmp.ne.s32.totalorder %s139, %s142
      %p148 = scmp.eq.s32.totalorder %s9, 0
      %p149 = por %p147, %p148
      %p150 = scmp.ne.s32.totalorder %s139, %s142
      %p151 = scmp.eq.s32.totalorder %s14, 3
      %p152 = por %p150, %p151
      %p153 = scmp.ne.s32.totalorder %s142, %s143
      %p154 = scmp.eq.s32.totalorder %s14, 0
      %p155 = por %p153, %p154
      %p156 = scmp.ne.s32.totalorder %s142, %s143
      %p157 = scmp.eq.s32.totalorder %s15, 3
      %p158 = por %p156, %p157
      %p160 = scmp.ne.s32.totalorder %s143, %s159
      %p161 = scmp.eq.s32.totalorder %s15, 0
      %p162 = por %p160, %p161
      %p163 = scmp.le.s32.totalorder 1, %s9
      %p164 = scmp.lt.s32.totalorder %s9, 5
      %p165 = pnand %p163, %p164
      %p166 = pneg %p165
      // Predicated region
      $region9: #{transformer_forward.18} parent=5 // pred_check
        _
      $region10: #{transformer_forward.18} parent=5 // pred_check_branch
        %168 = sbr.rel (%p165) target = $region12
      $region11: #{transformer_forward.18} parent=5 // pred_region
        %s169 = ssub.s32 %s9, 1
      $region12: #{transformer_forward.18} parent=5 // pred_fallthru
        _
      %p170 = scmp.lt.s32.totalorder %s9, 4
      // Predicated region
      $region13: #{transformer_forward.18} parent=5 // pred_check
        %p171 = pneg %p170
      $region14: #{transformer_forward.18} parent=5 // pred_check_branch
        %173 = sbr.rel (%p171) target = $region16
      $region15: #{transformer_forward.18} parent=5 // pred_region
        // Predicated region
        $region17: #{transformer_forward.18} parent=15 // pred_check
          %p174 = pneg %p59
        $region18: #{transformer_forward.18} parent=15 // pred_check_branch
          %176 = sbr.rel (%p174) target = $region20
        $region19: #{transformer_forward.18} parent=15 // pred_region
          %p177 = scmp.lt.s32.totalorder %s16, 1
          %s178 = scalar_select %p177, %s16, 1
          %p179 = scmp.lt.s32.totalorder %s17, 1
          %s180 = scalar_select %p179, %s17, 1
          %p181 = scmp.lt.s32.totalorder %s18, 0
          %s182 = scalar_select %p181, %s18, 0
          %s183 = smul.addr %s180, 2
          %s184 = sadd.s32 %s182, %s183
          %s185 = smul.addr %s178, 4
          %s186 = sadd.s32 %s184, %s185
          %s187 = smul.addr %s186, 4
          %s188 = scalar_lea.vmem %s0, %s187
        $region20: #{transformer_forward.18} parent=15 // pred_fallthru
          _
        // Predicated region
        $region21: #{transformer_forward.18} parent=15 // pred_check
          %p189 = pneg %p89
        $region22: #{transformer_forward.18} parent=15 // pred_check_branch
          %191 = sbr.rel (%p189) target = $region24
        $region23: #{transformer_forward.18} parent=15 // pred_region
          %s192 = smul.u32 2, %s19
          %p193 = scmp.lt.s32.totalorder %s16, 3
          %s194 = scalar_select %p193, %s16, 3
          %p195 = scmp.lt.s32.totalorder %s17, 1
          %s196 = scalar_select %p195, %s17, 1
          %p197 = scmp.lt.s32.totalorder %s192, 1
          %s198 = scalar_select %p197, %s192, 1
          %s199 = smul.addr %s196, 2
          %s200 = sadd.s32 %s198, %s199
          %s201 = smul.addr %s194, 4
          %s202 = sadd.s32 %s200, %s201
          %s203 = smul.addr %s202, 4
          %s204 = scalar_lea.vmem %s1, %s203
          %s205 = smul.u32 2, %s19
        $region24: #{transformer_forward.18} parent=15 // pred_fallthru
          _
        // Predicated region
        $region25: #{transformer_forward.18} parent=15 // pred_check
          %p206 = pneg %p119
        $region26: #{transformer_forward.18} parent=15 // pred_check_branch
          %208 = sbr.rel (%p206) target = $region28
        $region27: #{transformer_forward.18} parent=15 // pred_region
          %s209 = smul.u32 2, %s19
          %p210 = scmp.lt.s32.totalorder %s16, 3
          %s211 = scalar_select %p210, %s16, 3
          %p212 = scmp.lt.s32.totalorder %s17, 1
          %s213 = scalar_select %p212, %s17, 1
          %p214 = scmp.lt.s32.totalorder %s209, 1
          %s215 = scalar_select %p214, %s209, 1
          %s216 = smul.addr %s213, 2
          %s217 = sadd.s32 %s215, %s216
          %s218 = smul.addr %s211, 4
          %s219 = sadd.s32 %s217, %s218
          %s220 = smul.addr %s219, 4
          %s221 = scalar_lea.vmem %s2, %s220
          %s222 = smul.u32 2, %s19
        $region28: #{transformer_forward.18} parent=15 // pred_fallthru
          _
      $region16: #{transformer_forward.18} parent=5 // pred_fallthru
        _
      %p223 = scmp.le.s32.totalorder 1, %s9
      %p224 = scmp.lt.s32.totalorder %s9, 5
      %p225 = pnand %p223, %p224
      %p226 = pneg %p225
      // Predicated region
      $region29: #{transformer_forward.18} parent=5 // pred_check
        _
      $region30: #{transformer_forward.18} parent=5 // pred_check_branch
        %228 = sbr.rel (%p225) target = $region32
      $region31: #{transformer_forward.18} parent=5 // pred_region
        %s229 = ssub.s32 %s9, 1
        %p230 = scmp.lt.s32.totalorder %s20, 1
        %s231 = scalar_select %p230, %s20, 1
        %p232 = scmp.lt.s32.totalorder %s21, 1
        %s233 = scalar_select %p232, %s21, 1
        %p234 = scmp.lt.s32.totalorder %s22, 0
        %s235 = scalar_select %p234, %s22, 0
        %s236 = smul.addr %s233, 2
        %s237 = sadd.s32 %s235, %s236
        %s238 = smul.addr %s231, 4
        %s239 = sadd.s32 %s237, %s238
        %s240 = smul.addr %s239, 4
        %s241 = scalar_lea.vmem %s0, %s240
        %p242 = pneg %p65
        %p243 = pneg %p62
        %s244 = smul.u32 2, %s23
        %p245 = scmp.lt.s32.totalorder %s20, 3
        %s246 = scalar_select %p245, %s20, 3
        %p247 = scmp.lt.s32.totalorder %s21, 1
        %s248 = scalar_select %p247, %s21, 1
        %p249 = scmp.lt.s32.totalorder %s244, 1
        %s250 = scalar_select %p249, %s244, 1
        %s251 = smul.addr %s248, 2
        %s252 = sadd.s32 %s250, %s251
        %s253 = smul.addr %s246, 4
        %s254 = sadd.s32 %s252, %s253
        %s255 = smul.addr %s254, 4
        %s256 = scalar_lea.vmem %s1, %s255
        %p257 = pneg %p95
        %p258 = pneg %p92
        %s259 = smul.u32 2, %s23
        %p260 = scmp.lt.s32.totalorder %s20, 3
        %s261 = scalar_select %p260, %s20, 3
        %p262 = scmp.lt.s32.totalorder %s21, 1
        %s263 = scalar_select %p262, %s21, 1
        %p264 = scmp.lt.s32.totalorder %s259, 1
        %s265 = scalar_select %p264, %s259, 1
        %s266 = smul.addr %s263, 2
        %s267 = sadd.s32 %s265, %s266
        %s268 = smul.addr %s261, 4
        %s269 = sadd.s32 %s267, %s268
        %s270 = smul.addr %s269, 4
        %s271 = scalar_lea.vmem %s2, %s270
        %p272 = pneg %p125
        %p273 = pneg %p122
        %p274 = pneg %p155
        %p275 = pneg %p152
        %s276 = sand.u32 %s142, 1
        %s277 = sand.u32 %s142, 1
        %s278 = smul.addr %s277, 8
        %s279 = scalar_lea.vmem [#allocation5], %s278
        %p280 = scmp.lt.s32.totalorder %s20, 1
        %s281 = scalar_select %p280, %s20, 1
        %p282 = scmp.lt.s32.totalorder %s21, 1
        %s283 = scalar_select %p282, %s21, 1
        %p284 = scmp.lt.s32.totalorder %s22, 0
        %s285 = scalar_select %p284, %s22, 0
        %s286 = smul.addr %s283, 2
        %s287 = sadd.s32 %s285, %s286
        %s288 = smul.addr %s281, 4
        %s289 = sadd.s32 %s287, %s288
        %s290 = smul.addr %s289, 4
        %s291 = scalar_lea.vmem %s0, %s290
        %s292 = smul.u32 2, %s23
        %p293 = scmp.lt.s32.totalorder %s20, 3
        %s294 = scalar_select %p293, %s20, 3
        %p295 = scmp.lt.s32.totalorder %s21, 1
        %s296 = scalar_select %p295, %s21, 1
        %p297 = scmp.lt.s32.totalorder %s292, 1
        %s298 = scalar_select %p297, %s292, 1
        %s299 = smul.addr %s296, 2
        %s300 = sadd.s32 %s298, %s299
        %s301 = smul.addr %s294, 4
        %s302 = sadd.s32 %s300, %s301
        %s303 = smul.addr %s302, 4
        %s304 = scalar_lea.vmem %s1, %s303
        %s305 = smul.u32 2, %s23
        %s306 = smul.u32 2, %s23
        %p307 = scmp.lt.s32.totalorder %s20, 3
        %s308 = scalar_select %p307, %s20, 3
        %p309 = scmp.lt.s32.totalorder %s21, 1
        %s310 = scalar_select %p309, %s21, 1
        %p311 = scmp.lt.s32.totalorder %s306, 1
        %s312 = scalar_select %p311, %s306, 1
        %s313 = smul.addr %s310, 2
        %s314 = sadd.s32 %s312, %s313
        %s315 = smul.addr %s308, 4
        %s316 = sadd.s32 %s314, %s315
        %s317 = smul.addr %s316, 4
        %s318 = scalar_lea.vmem %s2, %s317
        %s319 = smul.u32 2, %s23
        %s320 = smul.u32 8, %s22
        %p322 = scmp.eq.s32.totalorder %s23, 0
        // Predicated region
        $region33: #{transformer_forward.18} parent=31 // pred_check
          %p323 = pneg %p322
        $region34: #{transformer_forward.18} parent=31 // pred_check_branch
          %325 = sbr.rel (%p323) target = $region36
        $region35: #{transformer_forward.18} parent=31 // pred_region
          %vm326 = vcmask 7168
          %327 = vst.msk [vmem:[#allocation2] sm:$0xff] %vm326, -inf
          %328 = vst.msk [vmem:[#allocation2 + $0x8] sm:$0xff] %vm326, -inf
          %329 = vst.msk [vmem:[#allocation3] sm:$0xff] %vm326, 0.0
          %330 = vst.msk [vmem:[#allocation3 + $0x8] sm:$0xff] %vm326, 0.0
          %vm331 = vcmask 130048
          %332 = vst.msk [vmem:[#allocation4] sm:$0xff] %vm331, 0.0
          %333 = vst.msk [vmem:[#allocation4 + $0x8] sm:$0xff] %vm331, 0.0
        $region36: #{transformer_forward.18} parent=31 // pred_fallthru
          _
        %s334 = smul.u32 %s22, 8
        %s335 = smul.u32 %s23, 16
        %s336 = sadd.s32 %s334, 7
        %p337 = scmp.le.s32.totalorder %s335, %s336
        // Predicated region
        $region37: #{transformer_forward.18} parent=31 // pred_check
          %p338 = pneg %p337
        $region38: #{transformer_forward.18} parent=31 // pred_check_branch
          %340 = sbr.rel (%p338) target = $region40
        $region39: #{transformer_forward.18} parent=31 // pred_region
          %v341 = vld [vmem:[%s304] sm:$0xf]
          %v342 = vld [vmem:[%s304 + $0x4] sm:$0xf]
          %v343 = vld [vmem:[%s318] sm:$0xf]
          %v344 = vld [vmem:[%s318 + $0x4] sm:$0xf]
          %v345 = vld [vmem:[%s291] sm:$0xf]
          %v346 = vld [vmem:[%s291 + $0x4] sm:$0xf]
          %v347 = vunpack.c.l.bf16 %v345
          %v348 = vunpack.c.l.bf16 %v346
          %v349 = vmul.f32 %v347, 0.25
          %v350 = vmul.f32 %v348, 0.25
          %v351 = vpack.c.bf16 %v349, %v349
          %v352 = vpack.c.bf16 %v350, %v350
          %v355 = vunpack.c.l.b16 %v351
          %v356 = vunpack.c.l.b16 %v352
          %v357 = vpack.c.b16 %v356, %v355
          %v360 = vunpack.c.l.b16 %v341
          %v361 = vunpack.c.l.b16 %v342
          %v362 = vpack.c.b16 %v361, %v360
          %vm363 = vcmask 130048
          %v365 = vsel %vm363, %v357, 0
          %v368 = vsel %vm363, %v362, 0
          %370 = vmatpush.bf16.xpose.msra.mxu0 0
          %371 = vmatpush.bf16.xpose.msra.mxu0 0
          %372 = vmatpush.bf16.xpose.msra.mxu0 0
          %373 = vmatpush.bf16.xpose.msra.mxu0 0
          %374 = vmatpush.bf16.xpose.msra.mxu0 0
          %375 = vmatpush.bf16.xpose.msra.mxu0 0
          %376 = vmatpush.bf16.xpose.msra.mxu0 0
          %377 = vmatpush.bf16.xpose.msra.mxu0 %v368
          %378 = vmatmul.bf16.gmra.mxu0 %v365
          %v379 = vpop.f32.mrf.mxu0
          %v380 = vadd.f32 0.0, %v379
          %v381 = vpop.f32.mrf.mxu0
          %v382 = vadd.f32 0.0, %v381
          %383 = vdwg.mxu0
          %s384 = sadd.s32 %s335, 15
          %p385 = scmp.le.s32.totalorder %s384, %s334
          // Predicated region
          $region41: #{transformer_forward.18} parent=39 // pred_check
            %p386 = pneg %p385
          $region42: #{transformer_forward.18} parent=39 // pred_check_branch
            %388 = sbr.rel (%p386) target = $region44
          $region43: #{transformer_forward.18} parent=39 // pred_region
            %v389 = vld [vmem:[#allocation2] sm:$0xff]
            %v390 = vld [vmem:[#allocation2 + $0x8] sm:$0xff]
            %v391 = vsel %vm363, %v380, -inf
            %392 = vmax.xlane.f32.xlu0 %v391
            %v393 = vpop.xlane.xlu0 %392
            %v394 = vsel %vm363, %v382, -inf
            %395 = vmax.xlane.f32.xlu0 %v394
            %v396 = vpop.xlane.xlu0 %395
            %v397 = vmax.f32 %v389, %v393
            %v398 = vmax.f32 %v390, %v396
            %v399 = vsub.f32 %v389, %v397
            %v400 = vsub.f32 %v390, %v398
            %v401 = vmul.f32 %v399, 1.442695
            %v402 = vpow.pop %v401
            %v403 = vmul.f32 %v400, 1.442695
            %v404 = vpow.pop %v403
            %406 = vset.pattern.permute.xlu0 0
            %407 = vperm.xlu0 %406, %v397
            %v408 = vpop.permute.xlu0 %407
            %411 = vset.pattern.permute.xlu0 0
            %412 = vperm.xlu0 %411, %v398
            %v413 = vpop.permute.xlu0 %412
            %v415 = vsub.f32 %v380, %v408
            %v416 = vsub.f32 %v382, %v413
            %v417 = vmul.f32 %v415, 1.442695
            %v418 = vpow.pop %v417
            %v419 = vmul.f32 %v416, 1.442695
            %v420 = vpow.pop %v419
            %v421 = vld [vmem:[#allocation3] sm:$0xff]
            %v422 = vld [vmem:[#allocation3 + $0x8] sm:$0xff]
            %v423 = vmul.f32 %v402, %v421
            %v424 = vmul.f32 %v404, %v422
            %v425 = vsel %vm363, %v418, 0.0
            %426 = vadd.xlane.f32.xlu0 %v425
            %v427 = vpop.xlane.xlu0 %426
            %v428 = vsel %vm363, %v420, 0.0
            %429 = vadd.xlane.f32.xlu0 %v428
            %v430 = vpop.xlane.xlu0 %429
            %v431 = vadd.f32 %v423, %v427
            %v432 = vadd.f32 %v424, %v430
            %vm433 = vcmask 7168
            %434 = vst.msk [vmem:[#allocation3] sm:$0xff] %vm433, %v431
            %435 = vst.msk [vmem:[#allocation3 + $0x8] sm:$0xff] %vm433, %v432
            %v436 = vld [vmem:[#allocation4] sm:$0xff]
            %v437 = vld [vmem:[#allocation4 + $0x8] sm:$0xff]
            %439 = vset.pattern.permute.xlu0 0
            %440 = vperm.xlu0 %439, %v402
            %v441 = vpop.permute.xlu0 %440
            %444 = vset.pattern.permute.xlu0 0
            %445 = vperm.xlu0 %444, %v404
            %v446 = vpop.permute.xlu0 %445
            %v448 = vmul.f32 %v441, %v436
            %v449 = vmul.f32 %v446, %v437
            %v450 = vpack.c.bf16 %v420, %v418
            %v453 = vunpack.c.l.b16 %v343
            %v454 = vunpack.c.l.b16 %v344
            %v455 = vpack.c.b16 %v454, %v453
            %v458 = vsel %vm363, %v450, 0
            %460 = vmatpush.bf16.msra.mxu0 0
            %461 = vmatpush.bf16.msra.mxu0 0
            %462 = vmatpush.bf16.msra.mxu0 0
            %463 = vmatpush.bf16.msra.mxu0 0
            %464 = vmatpush.bf16.msra.mxu0 0
            %465 = vmatpush.bf16.msra.mxu0 0
            %466 = vmatpush.bf16.msra.mxu0 0
            %467 = vmatpush.bf16.msra.mxu0 %v455
            %468 = vmatmul.bf16.gmra.mxu0 %v458
            %v469 = vpop.f32.mrf.mxu0
            %v470 = vadd.f32 0.0, %v469
            %v471 = vpop.f32.mrf.mxu0
            %v472 = vadd.f32 0.0, %v471
            %473 = vdwg.mxu0
            %v474 = vadd.f32 %v448, %v470
            %v475 = vadd.f32 %v449, %v472
            %476 = vst.msk [vmem:[#allocation4] sm:$0xff] %vm363, %v474
            %477 = vst.msk [vmem:[#allocation4 + $0x8] sm:$0xff] %vm363, %v475
            %478 = vst.msk [vmem:[#allocation2] sm:$0xff] %vm433, %v397
            %479 = vst.msk [vmem:[#allocation2 + $0x8] sm:$0xff] %vm433, %v398
          $region44: #{transformer_forward.18} parent=39 // pred_fallthru
            _
          %p480 = scmp.gt.s32.totalorder %s384, %s334
          // Predicated region
          $region45: #{transformer_forward.18} parent=39 // pred_check
            %p481 = pneg %p480
          $region46: #{transformer_forward.18} parent=39 // pred_check_branch
            %483 = sbr.rel (%p481) target = $region48
          $region47: #{transformer_forward.18} parent=39 // pred_region
            %v484 = vlaneseq
            %v485 = vshrl.u32 %v484, 7
            %v486 = vadd.s32 %v485, 8
            %vm487 = vcmp.lt.s32.totalorder %v485, 0
            %v488 = vsub.s32 0, %v485
            %v489 = vsel %vm487, %v488, %v485
            %v490 = vshrl.u32 %v489, 3
            %v491 = vand.u32 %v489, 7
            %v492 = vsub.s32 0, %v491
            %v493 = vsel %vm487, %v492, %v491
            %vm494 = vcmp.lt.s32.totalorder %v486, 0
            %v495 = vsub.s32 0, %v486
            %v496 = vsel %vm494, %v495, %v486
            %v497 = vshrl.u32 %v496, 3
            %v498 = vand.u32 %v496, 7
            %v499 = vsub.s32 0, %v498
            %v500 = vsel %vm494, %v499, %v498
            %vm501 = vcmp.ne.s32.totalorder %v493, 0
            %vm502 = vcmp.ne.s32.totalorder %v500, 0
            %vm503 = vcmp.lt.s32.totalorder %v493, 0
            %vm504 = vcmp.lt.s32.totalorder %v500, 0
            %vm505 = vmand %vm503, %vm501
            %vm506 = vmand %vm504, %vm502
            %v507 = vadd.s32 %v493, 8
            %v508 = vadd.s32 %v500, 8
            %v509 = vsel %vm505, %v507, %v493
            %v510 = vsel %vm506, %v508, %v500
            %v511 = vstv %s334
            %v512 = vadd.s32 %v511, %v509
            %v513 = vadd.s32 %v511, %v510
            %v514 = vlaneseq
            %v515 = vand.u32 %v514, 127
            %v516 = vstv %s335
            %v517 = vadd.s32 %v516, %v515
            %vm518 = vcmp.le.s32.totalorder %v517, %v512
            %vm519 = vcmp.le.s32.totalorder %v517, %v513
            %v520 = vsel %vm518, %v380, -1e+30
            %v521 = vsel %vm519, %v382, -1e+30
            %v522 = vld [vmem:[#allocation2] sm:$0xff]
            %v523 = vld [vmem:[#allocation2 + $0x8] sm:$0xff]
            %v524 = vsel %vm363, %v520, -inf
            %525 = vmax.xlane.f32.xlu0 %v524
            %v526 = vpop.xlane.xlu0 %525
            %v527 = vsel %vm363, %v521, -inf
            %528 = vmax.xlane.f32.xlu0 %v527
            %v529 = vpop.xlane.xlu0 %528
            %v530 = vmax.f32 %v522, %v526
            %v531 = vmax.f32 %v523, %v529
            %v532 = vsub.f32 %v522, %v530
            %v533 = vsub.f32 %v523, %v531
            %v534 = vmul.f32 %v532, 1.442695
            %v535 = vpow.pop %v534
            %v536 = vmul.f32 %v533, 1.442695
            %v537 = vpow.pop %v536
            %539 = vset.pattern.permute.xlu0 0
            %540 = vperm.xlu0 %539, %v530
            %v541 = vpop.permute.xlu0 %540
            %544 = vset.pattern.permute.xlu0 0
            %545 = vperm.xlu0 %544, %v531
            %v546 = vpop.permute.xlu0 %545
            %v548 = vsub.f32 %v520, %v541
            %v549 = vsub.f32 %v521, %v546
            %v550 = vmul.f32 %v548, 1.442695
            %v551 = vpow.pop %v550
            %v552 = vmul.f32 %v549, 1.442695
            %v553 = vpow.pop %v552
            %v554 = vld [vmem:[#allocation3] sm:$0xff]
            %v555 = vld [vmem:[#allocation3 + $0x8] sm:$0xff]
            %v556 = vmul.f32 %v535, %v554
            %v557 = vmul.f32 %v537, %v555
            %v558 = vsel %vm363, %v551, 0.0
            %559 = vadd.xlane.f32.xlu0 %v558
            %v560 = vpop.xlane.xlu0 %559
            %v561 = vsel %vm363, %v553, 0.0
            %562 = vadd.xlane.f32.xlu0 %v561
            %v563 = vpop.xlane.xlu0 %562
            %v564 = vadd.f32 %v556, %v560
            %v565 = vadd.f32 %v557, %v563
            %vm566 = vcmask 7168
            %567 = vst.msk [vmem:[#allocation3] sm:$0xff] %vm566, %v564
            %568 = vst.msk [vmem:[#allocation3 + $0x8] sm:$0xff] %vm566, %v565
            %v569 = vld [vmem:[#allocation4] sm:$0xff]
            %v570 = vld [vmem:[#allocation4 + $0x8] sm:$0xff]
            %572 = vset.pattern.permute.xlu0 0
            %573 = vperm.xlu0 %572, %v535
            %v574 = vpop.permute.xlu0 %573
            %577 = vset.pattern.permute.xlu0 0
            %578 = vperm.xlu0 %577, %v537
            %v579 = vpop.permute.xlu0 %578
            %v581 = vmul.f32 %v574, %v569
            %v582 = vmul.f32 %v579, %v570
            %v583 = vpack.c.bf16 %v553, %v551
            %v586 = vunpack.c.l.b16 %v343
            %v587 = vunpack.c.l.b16 %v344
            %v588 = vpack.c.b16 %v587, %v586
            %v591 = vsel %vm363, %v583, 0
            %593 = vmatpush.bf16.msra.mxu0 0
            %594 = vmatpush.bf16.msra.mxu0 0
            %595 = vmatpush.bf16.msra.mxu0 0
            %596 = vmatpush.bf16.msra.mxu0 0
            %597 = vmatpush.bf16.msra.mxu0 0
            %598 = vmatpush.bf16.msra.mxu0 0
            %599 = vmatpush.bf16.msra.mxu0 0
            %600 = vmatpush.bf16.msra.mxu0 %v588
            %601 = vmatmul.bf16.gmra.mxu0 %v591
            %v602 = vpop.f32.mrf.mxu0
            %v603 = vadd.f32 0.0, %v602
            %v604 = vpop.f32.mrf.mxu0
            %v605 = vadd.f32 0.0, %v604
            %606 = vdwg.mxu0
            %v607 = vadd.f32 %v581, %v603
            %v608 = vadd.f32 %v582, %v605
            %609 = vst.msk [vmem:[#allocation4] sm:$0xff] %vm363, %v607
            %610 = vst.msk [vmem:[#allocation4 + $0x8] sm:$0xff] %vm363, %v608
            %611 = vst.msk [vmem:[#allocation2] sm:$0xff] %vm566, %v530
            %612 = vst.msk [vmem:[#allocation2 + $0x8] sm:$0xff] %vm566, %v531
          $region48: #{transformer_forward.18} parent=39 // pred_fallthru
            _
        $region40: #{transformer_forward.18} parent=31 // pred_fallthru
          _
        // Predicated region
        $region49: #{transformer_forward.18} parent=31 // pred_check
          %p613 = pneg %p322
        $region50: #{transformer_forward.18} parent=31 // pred_check_branch
          %615 = sbr.rel (%p613) target = $region52
        $region51: #{transformer_forward.18} parent=31 // pred_region
          %v616 = vld [vmem:[#allocation3] sm:$0xff]
          %v617 = vld [vmem:[#allocation3 + $0x8] sm:$0xff]
          %v618 = vrcp.pop %v616
          %v619 = vmul.f32 %v616, %v618
          %v620 = vsub.f32 1.0, %v619
          %v621 = vmul.f32 %v618, %v620
          %v622 = vadd.f32 %v618, %v621
          %vm623 = vweird.f32 %v616
          %vm624 = vweird.f32 %v618
          %vm625 = vmor %vm623, %vm624
          %v626 = vsel %vm625, %v618, %v622
          %v627 = vand.u32 2147483647, %v616
          %vm628 = vcmp.eq.f32.partialorder %v627, 8.507059e+37
          %v629 = vand.u32 %v616, 2147483648
          %v630 = vor.u32 1.1754944e-38, %v629
          %v631 = vsel %vm628, %v630, %v626
          %v632 = vrcp.pop %v617
          %v633 = vmul.f32 %v617, %v632
          %v634 = vsub.f32 1.0, %v633
          %v635 = vmul.f32 %v632, %v634
          %v636 = vadd.f32 %v632, %v635
          %vm637 = vweird.f32 %v617
          %vm638 = vweird.f32 %v632
          %vm639 = vmor %vm637, %vm638
          %v640 = vsel %vm639, %v632, %v636
          %v641 = vand.u32 2147483647, %v617
          %vm642 = vcmp.eq.f32.partialorder %v641, 8.507059e+37
          %v643 = vand.u32 %v617, 2147483648
          %v644 = vor.u32 1.1754944e-38, %v643
          %v645 = vsel %vm642, %v644, %v640
          %v646 = vld [vmem:[#allocation4] sm:$0xff]
          %v647 = vld [vmem:[#allocation4 + $0x8] sm:$0xff]
          %649 = vset.pattern.permute.xlu0 0
          %650 = vperm.xlu0 %649, %v631
          %v651 = vpop.permute.xlu0 %650
          %654 = vset.pattern.permute.xlu0 0
          %655 = vperm.xlu0 %654, %v645
          %v656 = vpop.permute.xlu0 %655
          %v658 = vmul.f32 %v646, %v651
          %v659 = vmul.f32 %v647, %v656
          %v660 = vpack.c.bf16 %v658, %v658
          %v661 = vpack.c.bf16 %v659, %v659
          %v663 = vrot.slane %v660, 3
          %vm664 = vcmask 1040384
          %v667 = vsel %vm664, %v660, %v663
          %vm669 = vcmask 1041409
          %v670 = vsel %vm669, %v660, %v663
          %v672 = vrot.slane %v670, 1
          %vm673 = vcmask 1042434
          %v674 = vsel %vm673, %v660, %v663
          %v676 = vrot.slane %v674, 2
          %vm677 = vcmask 1043459
          %v678 = vsel %vm677, %v660, %v663
          %v680 = vrot.slane %v678, 3
          %v681 = vunpack.i.l.s16 %v667
          %v682 = vunpack.i.h.s16 %v667
          %v683 = vunpack.i.l.s16 %v672
          %v684 = vunpack.i.h.s16 %v672
          %v685 = vunpack.i.l.s16 %v676
          %v686 = vunpack.i.h.s16 %v676
          %v687 = vunpack.i.l.s16 %v680
          %v688 = vunpack.i.h.s16 %v680
          %v689 = vpack.i.b16 %v681, %v681
          %v690 = vpack.i.b16 %v682, %v682
          %v691 = vpack.i.b16 %v683, %v683
          %v692 = vpack.i.b16 %v684, %v684
          %v693 = vpack.i.b16 %v685, %v685
          %v694 = vpack.i.b16 %v686, %v686
          %v695 = vpack.i.b16 %v687, %v687
          %v696 = vpack.i.b16 %v688, %v688
          %vm705 = vcmask 122880
          %vm706 = vsmask.f32 256
          %vm707 = vmand %vm705, %vm706
          %v708 = vld [vmem:[%s279] sm:$0x1]
          %v709 = vsel %vm707, %v689, %v708
          %710 = vst [vmem:[%s279] sm:$0x1] %v709
          %v711 = vld [vmem:[%s279 + $0x1] sm:$0x1]
          %v712 = vsel %vm707, %v690, %v711
          %713 = vst [vmem:[%s279 + $0x1] sm:$0x1] %v712
          %v714 = vld [vmem:[%s279 + $0x2] sm:$0x1]
          %v715 = vsel %vm707, %v691, %v714
          %716 = vst [vmem:[%s279 + $0x2] sm:$0x1] %v715
          %v717 = vld [vmem:[%s279 + $0x3] sm:$0x1]
          %v718 = vsel %vm707, %v692, %v717
          %719 = vst [vmem:[%s279 + $0x3] sm:$0x1] %v718
          %v720 = vld [vmem:[%s279 + $0x4] sm:$0x1]
          %v721 = vsel %vm707, %v693, %v720
          %722 = vst [vmem:[%s279 + $0x4] sm:$0x1] %v721
          %v723 = vld [vmem:[%s279 + $0x5] sm:$0x1]
          %v724 = vsel %vm707, %v694, %v723
          %725 = vst [vmem:[%s279 + $0x5] sm:$0x1] %v724
          %v726 = vld [vmem:[%s279 + $0x6] sm:$0x1]
          %v727 = vsel %vm707, %v695, %v726
          %728 = vst [vmem:[%s279 + $0x6] sm:$0x1] %v727
          %v729 = vld [vmem:[%s279 + $0x7] sm:$0x1]
          %v730 = vsel %vm707, %v696, %v729
          %731 = vst [vmem:[%s279 + $0x7] sm:$0x1] %v730
          %v733 = vrot.slane %v661, 3
          %v736 = vsel %vm664, %v661, %v733
          %v738 = vsel %vm669, %v661, %v733
          %v740 = vrot.slane %v738, 1
          %v741 = vsel %vm673, %v661, %v733
          %v743 = vrot.slane %v741, 2
          %v744 = vsel %vm677, %v661, %v733
          %v746 = vrot.slane %v744, 3
          %v747 = vunpack.i.l.s16 %v736
          %v748 = vunpack.i.h.s16 %v736
          %v749 = vunpack.i.l.s16 %v740
          %v750 = vunpack.i.h.s16 %v740
          %v751 = vunpack.i.l.s16 %v743
          %v752 = vunpack.i.h.s16 %v743
          %v753 = vunpack.i.l.s16 %v746
          %v754 = vunpack.i.h.s16 %v746
          %v755 = vpack.i.b16 %v747, %v747
          %v756 = vpack.i.b16 %v748, %v748
          %v757 = vpack.i.b16 %v749, %v749
          %v758 = vpack.i.b16 %v750, %v750
          %v759 = vpack.i.b16 %v751, %v751
          %v760 = vpack.i.b16 %v752, %v752
          %v761 = vpack.i.b16 %v753, %v753
          %v762 = vpack.i.b16 %v754, %v754
          %vm771 = vsmask.f32 7938
          %vm772 = vmand %vm705, %vm771
          %v773 = vld [vmem:[%s279] sm:$0x1]
          %v774 = vsel %vm772, %v755, %v773
          %775 = vst [vmem:[%s279] sm:$0x1] %v774
          %v776 = vld [vmem:[%s279 + $0x1] sm:$0x1]
          %v777 = vsel %vm772, %v756, %v776
          %778 = vst [vmem:[%s279 + $0x1] sm:$0x1] %v777
          %v779 = vld [vmem:[%s279 + $0x2] sm:$0x1]
          %v780 = vsel %vm772, %v757, %v779
          %781 = vst [vmem:[%s279 + $0x2] sm:$0x1] %v780
          %v782 = vld [vmem:[%s279 + $0x3] sm:$0x1]
          %v783 = vsel %vm772, %v758, %v782
          %784 = vst [vmem:[%s279 + $0x3] sm:$0x1] %v783
          %v785 = vld [vmem:[%s279 + $0x4] sm:$0x1]
          %v786 = vsel %vm772, %v759, %v785
          %787 = vst [vmem:[%s279 + $0x4] sm:$0x1] %v786
          %v788 = vld [vmem:[%s279 + $0x5] sm:$0x1]
          %v789 = vsel %vm772, %v760, %v788
          %790 = vst [vmem:[%s279 + $0x5] sm:$0x1] %v789
          %v791 = vld [vmem:[%s279 + $0x6] sm:$0x1]
          %v792 = vsel %vm772, %v761, %v791
          %793 = vst [vmem:[%s279 + $0x6] sm:$0x1] %v792
          %v794 = vld [vmem:[%s279 + $0x7] sm:$0x1]
          %v795 = vsel %vm772, %v762, %v794
          %796 = vst [vmem:[%s279 + $0x7] sm:$0x1] %v795
        $region52: #{transformer_forward.18} parent=31 // pred_fallthru
          _
        %s797 = sand.u32 %s142, 1
        %s798 = sand.u32 %s142, 1
        %s799 = smul.addr %s798, 8
        %s800 = scalar_lea.vmem [#allocation5], %s799
        // Predicated region
        $region53: #{transformer_forward.18} parent=31 // pred_check
          %p801 = pneg %p152
        $region54: #{transformer_forward.18} parent=31 // pred_check_branch
          %803 = sbr.rel (%p801) target = $region56
        $region55: #{transformer_forward.18} parent=31 // pred_region
          %s804 = smul.u32 8, %s22
          %s805 = smul.addr %s804, 2
          %s806 = sadd.s32 %s21, %s805
          %s807 = smul.addr %s20, 16
          %s808 = sadd.s32 %s806, %s807
          %s809 = scalar_lea.vmem %s3, %s808
          // Predicated region
          $region57: #{transformer_forward.18} parent=55 // pred_check
            _
          $region58: #{transformer_forward.18} parent=55 // pred_check_branch
            %811 = sbr.rel (0) target = $region60
          $region59: #{transformer_forward.18} parent=55 // pred_region
            // Predicated region
            $region61: #{transformer_forward.18} parent=59 // pred_check
              _
            $region62: #{transformer_forward.18} parent=59 // pred_check_branch
              %813 = sbr.rel target = $region64
            $region63: #{transformer_forward.18} parent=59 // pred_region
              // Predicated region
              $region76: #{transformer_forward.18} parent=63 // pred_check
                _
              $region77: #{transformer_forward.18} parent=63 // pred_check_branch
                %843 = sbr.rel (0) target = $region79
              $region78: #{transformer_forward.18} parent=63 // pred_region
                loop: start=0, step=1, limit=1
                $region80: #{transformer_forward.18} parent=78 // loop_pre_header
                  _
                $region81: #{transformer_forward.18} parent=78 // loop_header
                  %s845 = sphi 0, %s849
                  %p846 = scmp.ge.s32.totalorder %s845, 1
                  %s850 = sphi %s800, %s800
                  %s851 = sphi %s809, %s809
                $region82: #{transformer_forward.18} parent=78 // loop_header_branch
                  %848 = sbr.rel (%p846) target = $region86
                $region83: #{transformer_forward.18} parent=78 // loop_body
                  _
                $region84: #{transformer_forward.18} parent=78 // loop_footer
                  %s849 = sadd.s32 1, %s845
                $region85: #{transformer_forward.18} parent=78 // loop_footer_branch
                  %844 = sbr.rel target = $region81
                $region86: #{transformer_forward.18} parent=78 // loop_exit
                  _
                %s853 = ssub.s32 2, 1
                loop: start=0, step=1, limit=1
                $region87: #{transformer_forward.18} parent=78 // loop_pre_header
                  _
                $region88: #{transformer_forward.18} parent=78 // loop_header
                  %s855 = sphi 0, %s859
                  %p856 = scmp.ge.s32.totalorder %s855, 1
                  %s860 = sphi %s800, %s800
                  %s861 = sphi %s809, %s809
                $region89: #{transformer_forward.18} parent=78 // loop_header_branch
                  %858 = sbr.rel (%p856) target = $region93
                $region90: #{transformer_forward.18} parent=78 // loop_body
                  %v862 = vld [vmem:[%s860] sm:%s853]
                  %863 = vst [vmem:[%s861] sm:%s853] %v862
                  %v864 = vld [vmem:[%s860 + $0x1] sm:%s853]
                  %865 = vst [vmem:[%s861 + $0x2] sm:%s853] %v864
                  %v866 = vld [vmem:[%s860 + $0x2] sm:%s853]
                  %867 = vst [vmem:[%s861 + $0x4] sm:%s853] %v866
                  %v868 = vld [vmem:[%s860 + $0x3] sm:%s853]
                  %869 = vst [vmem:[%s861 + $0x6] sm:%s853] %v868
                  %v870 = vld [vmem:[%s860 + $0x4] sm:%s853]
                  %871 = vst [vmem:[%s861 + $0x8] sm:%s853] %v870
                  %v872 = vld [vmem:[%s860 + $0x5] sm:%s853]
                  %873 = vst [vmem:[%s861 + $0xa] sm:%s853] %v872
                  %v874 = vld [vmem:[%s860 + $0x6] sm:%s853]
                  %875 = vst [vmem:[%s861 + $0xc] sm:%s853] %v874
                  %v876 = vld [vmem:[%s860 + $0x7] sm:%s853]
                  %877 = vst [vmem:[%s861 + $0xe] sm:%s853] %v876
                $region91: #{transformer_forward.18} parent=78 // loop_footer
                  %s859 = sadd.s32 1, %s855
                $region92: #{transformer_forward.18} parent=78 // loop_footer_branch
                  %854 = sbr.rel target = $region88
                $region93: #{transformer_forward.18} parent=78 // loop_exit
                  _
              $region79: #{transformer_forward.18} parent=63 // pred_fallthru
                _
            $region64: #{transformer_forward.18} parent=59 // pred_fallthru
              _
            // Predicated region
            $region65: #{transformer_forward.18} parent=59 // pred_check
              _
            $region66: #{transformer_forward.18} parent=59 // pred_check_branch
              %815 = sbr.rel (0) target = $region68
            $region67: #{transformer_forward.18} parent=59 // pred_region
              %s817 = ssub.s32 2, 1
              loop: start=0, step=1, limit=1
              $region69: #{transformer_forward.18} parent=67 // loop_pre_header
                _
              $region70: #{transformer_forward.18} parent=67 // loop_header
                %s819 = sphi 0, %s823
                %p820 = scmp.ge.s32.totalorder %s819, 1
                %s824 = sphi %s800, %s800
                %s825 = sphi %s809, %s809
              $region71: #{transformer_forward.18} parent=67 // loop_header_branch
                %822 = sbr.rel (%p820) target = $region75
              $region72: #{transformer_forward.18} parent=67 // loop_body
                %v826 = vld [vmem:[%s824] sm:%s817]
                %827 = vst [vmem:[%s825] sm:%s817] %v826
                %v828 = vld [vmem:[%s824 + $0x1] sm:%s817]
                %829 = vst [vmem:[%s825 + $0x2] sm:%s817] %v828
                %v830 = vld [vmem:[%s824 + $0x2] sm:%s817]
                %831 = vst [vmem:[%s825 + $0x4] sm:%s817] %v830
                %v832 = vld [vmem:[%s824 + $0x3] sm:%s817]
                %833 = vst [vmem:[%s825 + $0x6] sm:%s817] %v832
                %v834 = vld [vmem:[%s824 + $0x4] sm:%s817]
                %835 = vst [vmem:[%s825 + $0x8] sm:%s817] %v834
                %v836 = vld [vmem:[%s824 + $0x5] sm:%s817]
                %837 = vst [vmem:[%s825 + $0xa] sm:%s817] %v836
                %v838 = vld [vmem:[%s824 + $0x6] sm:%s817]
                %839 = vst [vmem:[%s825 + $0xc] sm:%s817] %v838
                %v840 = vld [vmem:[%s824 + $0x7] sm:%s817]
                %841 = vst [vmem:[%s825 + $0xe] sm:%s817] %v840
              $region73: #{transformer_forward.18} parent=67 // loop_footer
                %s823 = sadd.s32 1, %s819
              $region74: #{transformer_forward.18} parent=67 // loop_footer_branch
                %818 = sbr.rel target = $region70
              $region75: #{transformer_forward.18} parent=67 // loop_exit
                _
            $region68: #{transformer_forward.18} parent=59 // pred_fallthru
              _
          $region60: #{transformer_forward.18} parent=55 // pred_fallthru
            _
          %878 = vnop
        $region56: #{transformer_forward.18} parent=31 // pred_fallthru
          _
      $region32: #{transformer_forward.18} parent=5 // pred_fallthru
        _
      %p879 = scmp.le.s32.totalorder 2, %s9
      // Predicated region
      $region94: #{transformer_forward.18} parent=5 // pred_check
        %p880 = pneg %p879
      $region95: #{transformer_forward.18} parent=5 // pred_check_branch
        %882 = sbr.rel (%p880) target = $region97
      $region96: #{transformer_forward.18} parent=5 // pred_region
        %s883 = ssub.s32 %s9, 2
        // Predicated region
        $region98: #{transformer_forward.18} parent=96 // pred_check
          %p884 = pneg %p158
        $region99: #{transformer_forward.18} parent=96 // pred_check_branch
          %886 = sbr.rel (%p884) target = $region101
        $region100: #{transformer_forward.18} parent=96 // pred_region
          %s887 = sand.u32 %s143, 1
          %s888 = sand.u32 %s143, 1
          %s889 = smul.addr %s888, 8
          %s890 = scalar_lea.vmem [#allocation5], %s889
        $region101: #{transformer_forward.18} parent=96 // pred_fallthru
          _
      $region97: #{transformer_forward.18} parent=5 // pred_fallthru
        _
    $region6: #{transformer_forward.18} parent=1 // loop_footer
      %s13 = sadd.s32 1, %s9
    $region7: #{transformer_forward.18} parent=1 // loop_footer_branch
      %8 = sbr.rel target = $region3
    $region8: #{transformer_forward.18} parent=1 // loop_exit
      _

// kernel: transformer_forward.22
$region0: #{transformer_forward.22}
  #allocation0 [shape = 'u32[]', space=smem, size = 0x4, offset = 0x4, fixed_abs, tag = 'smem constant byte address 0x4 - core index']
  #allocation1 [shape = 'u32[72,128]{1,0:T(1,128)}', space=vmem, size = 0x9000, scoped, tag = 'internal scratch']
  #allocation2 [shape = 'f32[16,64]{1,0:T(8,128)}', space=vmem, size = 0x2000, scoped, tag = 'scratch operand']
  %s0 = inlined_call_operand.vmem [shape: bf16[16,192], index: 0, kind: input, shape index: {}]
  %s1 = inlined_call_operand.vmem [shape: bf16[192,64], index: 1, kind: input, shape index: {}]
  %s2 = inlined_call_operand.vmem [shape: bf16[16,64], index: 2, kind: input, shape index: {}]
  %s3 = inlined_call_operand.vmem [shape: bf16[16,64], index: 3, kind: output, shape index: {}]
  %s4 = sld [smem:[#allocation0]]
  $region30: #{transformer_forward.22} parent=0
    _
  %s6 = ssub.s32 1, %s4
  %s7 = scalar_select 0, %s6, %s4
  // Predicated region
  $region2: #{transformer_forward.22} parent=0 // pred_check
    _
  $region3: #{transformer_forward.22} parent=0 // pred_check_branch
    %9 = sbr.rel (0) target = $region5
  $region4: #{transformer_forward.22} parent=0 // pred_region
    _
  $region5: #{transformer_forward.22} parent=0 // pred_fallthru
    _
  // Predicated region
  $region6: #{transformer_forward.22} parent=0 // pred_check
    _
  $region7: #{transformer_forward.22} parent=0 // pred_check_branch
    %11 = sbr.rel (0) target = $region9
  $region8: #{transformer_forward.22} parent=0 // pred_region
    _
  $region9: #{transformer_forward.22} parent=0 // pred_fallthru
    _
  // Predicated region
  $region10: #{transformer_forward.22} parent=0 // pred_check
    _
  $region11: #{transformer_forward.22} parent=0 // pred_check_branch
    %13 = sbr.rel (0) target = $region13
  $region12: #{transformer_forward.22} parent=0 // pred_region
    _
  $region13: #{transformer_forward.22} parent=0 // pred_fallthru
    _
  %p15 = scmp.eq.s32.totalorder 0, 0
  // Predicated region
  $region14: #{transformer_forward.22} parent=0 // pred_check
    %p16 = pneg %p15
  $region15: #{transformer_forward.22} parent=0 // pred_check_branch
    %18 = sbr.rel (%p16) target = $region17
  $region16: #{transformer_forward.22} parent=0 // pred_region
    %vm19 = vcmask 523264
    %20 = vst.msk [vmem:[#allocation2] sm:$0xff] %vm19, 0.0
    %21 = vst.msk [vmem:[#allocation2 + $0x8] sm:$0xff] %vm19, 0.0
  $region17: #{transformer_forward.22} parent=0 // pred_fallthru
    _
  %v22 = vld [vmem:[#allocation2] sm:$0xff]
  %v23 = vld [vmem:[#allocation2 + $0x8] sm:$0xff]
  %v24 = vld [vmem:[%s0] sm:$0xff]
  %v25 = vld [vmem:[%s0 + $0x8] sm:$0xff]
  %v26 = vld [vmem:[%s1] sm:$0xf]
  %v27 = vld [vmem:[%s1 + $0x4] sm:$0xf]
  %v28 = vld [vmem:[%s1 + $0x8] sm:$0xf]
  %v29 = vld [vmem:[%s1 + $0xc] sm:$0xf]
  %v30 = vld [vmem:[%s1 + $0x10] sm:$0xf]
  %v31 = vld [vmem:[%s1 + $0x14] sm:$0xf]
  %v32 = vld [vmem:[%s1 + $0x18] sm:$0xf]
  %v33 = vld [vmem:[%s1 + $0x1c] sm:$0xf]
  %v34 = vld [vmem:[%s1 + $0x20] sm:$0xf]
  %v35 = vld [vmem:[%s1 + $0x24] sm:$0xf]
  %v36 = vld [vmem:[%s1 + $0x28] sm:$0xf]
  %v37 = vld [vmem:[%s1 + $0x2c] sm:$0xf]
  %v38 = vld [vmem:[%s1 + $0x30] sm:$0xf]
  %v39 = vld [vmem:[%s1 + $0x34] sm:$0xf]
  %v40 = vld [vmem:[%s1 + $0x38] sm:$0xf]
  %v41 = vld [vmem:[%s1 + $0x3c] sm:$0xf]
  %v42 = vld [vmem:[%s1 + $0x40] sm:$0xf]
  %v43 = vld [vmem:[%s1 + $0x44] sm:$0xf]
  %v44 = vld [vmem:[%s1 + $0x48] sm:$0xf]
  %v45 = vld [vmem:[%s1 + $0x4c] sm:$0xf]
  %v46 = vld [vmem:[%s1 + $0x50] sm:$0xf]
  %v47 = vld [vmem:[%s1 + $0x54] sm:$0xf]
  %v48 = vld [vmem:[%s1 + $0x58] sm:$0xf]
  %v49 = vld [vmem:[%s1 + $0x5c] sm:$0xf]
  %v52 = vunpack.c.l.b16 %v24
  %v53 = vunpack.c.h.b16 %v24
  %v54 = vunpack.c.l.b16 %v25
  %v55 = vunpack.c.h.b16 %v25
  %v56 = vpack.c.b16 %v54, %v52
  %v57 = vpack.c.b16 %v55, %v53
  %v83 = vunpack.c.l.b16 %v26
  %v84 = vunpack.c.l.b16 %v27
  %v85 = vunpack.c.l.b16 %v28
  %v86 = vunpack.c.l.b16 %v29
  %v87 = vunpack.c.l.b16 %v30
  %v88 = vunpack.c.l.b16 %v31
  %v89 = vunpack.c.l.b16 %v32
  %v90 = vunpack.c.l.b16 %v33
  %v91 = vunpack.c.l.b16 %v34
  %v92 = vunpack.c.l.b16 %v35
  %v93 = vunpack.c.l.b16 %v36
  %v94 = vunpack.c.l.b16 %v37
  %v95 = vunpack.c.l.b16 %v38
  %v96 = vunpack.c.l.b16 %v39
  %v97 = vunpack.c.l.b16 %v40
  %v98 = vunpack.c.l.b16 %v41
  %v99 = vunpack.c.l.b16 %v42
  %v100 = vunpack.c.l.b16 %v43
  %v101 = vunpack.c.l.b16 %v44
  %v102 = vunpack.c.l.b16 %v45
  %v103 = vunpack.c.l.b16 %v46
  %v104 = vunpack.c.l.b16 %v47
  %v105 = vunpack.c.l.b16 %v48
  %v106 = vunpack.c.l.b16 %v49
  %v107 = vpack.c.b16 %v84, %v83
  %v108 = vpack.c.b16 %v86, %v85
  %v109 = vpack.c.b16 %v88, %v87
  %v110 = vpack.c.b16 %v90, %v89
  %v111 = vpack.c.b16 %v92, %v91
  %v112 = vpack.c.b16 %v94, %v93
  %v113 = vpack.c.b16 %v96, %v95
  %v114 = vpack.c.b16 %v98, %v97
  %v115 = vpack.c.b16 %v100, %v99
  %v116 = vpack.c.b16 %v102, %v101
  %v117 = vpack.c.b16 %v104, %v103
  %v118 = vpack.c.b16 %v106, %v105
  %vm131 = vcmask 523264
  %v133 = vsel %vm131, %v57, 0
  %135 = vmatpush.bf16.msra.mxu0 %v114
  %136 = vmatpush.bf16.msra.mxu0 %v113
  %137 = vmatpush.bf16.msra.mxu0 %v112
  %138 = vmatpush.bf16.msra.mxu0 %v111
  %139 = vmatpush.bf16.msra.mxu0 %v110
  %140 = vmatpush.bf16.msra.mxu0 %v109
  %141 = vmatpush.bf16.msra.mxu0 %v108
  %142 = vmatpush.bf16.msra.mxu0 %v107
  %143 = vmatmul.bf16.gmra.mxu0 %v56
  %v144 = vpop.f32.mrf.mxu0
  %v145 = vadd.f32 0.0, %v144
  %v146 = vpop.f32.mrf.mxu0
  %v147 = vadd.f32 0.0, %v146
  %148 = vdwg.mxu0
  %149 = vmatpush.bf16.msra.mxu0 0
  %150 = vmatpush.bf16.msra.mxu0 0
  %151 = vmatpush.bf16.msra.mxu0 0
  %152 = vmatpush.bf16.msra.mxu0 0
  %153 = vmatpush.bf16.msra.mxu0 %v118
  %154 = vmatpush.bf16.msra.mxu0 %v117
  %155 = vmatpush.bf16.msra.mxu0 %v116
  %156 = vmatpush.bf16.msra.mxu0 %v115
  %157 = vmatmul.bf16.gmra.mxu0 %v133
  %v158 = vpop.f32.mrf.mxu0
  %v159 = vadd.f32 %v145, %v158
  %v160 = vpop.f32.mrf.mxu0
  %v161 = vadd.f32 %v147, %v160
  %162 = vdwg.mxu0
  %v163 = vadd.f32 %v22, %v159
  %v164 = vadd.f32 %v23, %v161
  %165 = vst.msk [vmem:[#allocation2] sm:$0xff] %vm131, %v163
  %166 = vst.msk [vmem:[#allocation2 + $0x8] sm:$0xff] %vm131, %v164
  // Predicated region
  $region18: #{transformer_forward.22} parent=0 // pred_check
    %p167 = pneg %p15
  $region19: #{transformer_forward.22} parent=0 // pred_check_branch
    %169 = sbr.rel (%p167) target = $region21
  $region20: #{transformer_forward.22} parent=0 // pred_region
    %v170 = vld [vmem:[#allocation2] sm:$0xff]
    %v171 = vld [vmem:[#allocation2 + $0x8] sm:$0xff]
    %v172 = vld [vmem:[%s2] sm:$0xf]
    %v173 = vld [vmem:[%s2 + $0x4] sm:$0xf]
    %v174 = vunpack.c.l.bf16 %v172
    %v175 = vunpack.c.l.bf16 %v173
    %v176 = vadd.f32 %v170, %v174
    %v177 = vadd.f32 %v171, %v175
    %v178 = vpack.c.bf16 %v176, %v176
    %v179 = vpack.c.bf16 %v177, %v177
    %vm180 = vcmask 519168
    %181 = vst.msk [vmem:[%s3] sm:$0xf] %vm180, %v178
    %182 = vst.msk [vmem:[%s3 + $0x4] sm:$0xf] %vm180, %v179
  $region21: #{transformer_forward.22} parent=0 // pred_fallthru
    _
  // Predicated region
  $region22: #{transformer_forward.22} parent=0 // pred_check
    _
  $region23: #{transformer_forward.22} parent=0 // pred_check_branch
    %184 = sbr.rel (0) target = $region25
  $region24: #{transformer_forward.22} parent=0 // pred_region
    _
  $region25: #{transformer_forward.22} parent=0 // pred_fallthru
    _
  // Predicated region
  $region26: #{transformer_forward.22} parent=0 // pred_check
    _
  $region27: #{transformer_forward.22} parent=0 // pred_check_branch
    %186 = sbr.rel (0) target = $region29
  $region28: #{transformer_forward.22} parent=0 // pred_region
    _
  $region29: #{transformer_forward.22} parent=0 // pred_fallthru
    _

// kernel: transformer_forward.31
$region0: #{transformer_forward.31}
  #allocation0 [shape = 'u32[]', space=smem, size = 0x4, offset = 0x4, fixed_abs, tag = 'smem constant byte address 0x4 - core index']
  #allocation1 [shape = 'u32[72,128]{1,0:T(1,128)}', space=vmem, size = 0x9000, scoped, tag = 'internal scratch']
  #allocation2 [shape = 'f32[16,96]{1,0:T(8,128)}', space=vmem, size = 0x2000, scoped, tag = 'scratch operand']
  %s0 = inlined_call_operand.vmem [shape: bf16[16,64], index: 0, kind: input, shape index: {}]
  %s1 = inlined_call_operand.vmem [shape: bf16[64,96], index: 1, kind: input, shape index: {}]
  %s2 = inlined_call_operand.hbm [shape: f32[16,96], index: 2, kind: output, shape index: {}]
  %s3 = sld [smem:[#allocation0]]
  $region26: #{transformer_forward.31} parent=0
    _
  %s5 = ssub.s32 1, %s3
  %s6 = scalar_select 0, %s5, %s3
  $region1: #{transformer_forward.31} parent=0
    #allocation3 [shape = 'u8[8192]{0}', space=vmem, size = 0x2000, scoped, tag = 'output window, operand 0, single buffered']
    #allocation4 [shape = 's32[1]{0}', space=sflag, size = 0x4, scoped, tag = 'scoped memory for transformer_forward.31']
    %7 = vsyncpa [#allocation4], 0
    // Predicated region
    $region2: #{transformer_forward.31} parent=1 // pred_check
      _
    $region3: #{transformer_forward.31} parent=1 // pred_check_branch
      %9 = sbr.rel (0) target = $region5
    $region4: #{transformer_forward.31} parent=1 // pred_region
      _
    $region5: #{transformer_forward.31} parent=1 // pred_fallthru
      _
    // Predicated region
    $region6: #{transformer_forward.31} parent=1 // pred_check
      _
    $region7: #{transformer_forward.31} parent=1 // pred_check_branch
      %11 = sbr.rel (0) target = $region9
    $region8: #{transformer_forward.31} parent=1 // pred_region
      _
    $region9: #{transformer_forward.31} parent=1 // pred_fallthru
      _
    %p13 = scmp.eq.s32.totalorder 0, 0
    // Predicated region
    $region10: #{transformer_forward.31} parent=1 // pred_check
      %p14 = pneg %p13
    $region11: #{transformer_forward.31} parent=1 // pred_check_branch
      %16 = sbr.rel (%p14) target = $region13
    $region12: #{transformer_forward.31} parent=1 // pred_region
      %vm17 = vcmask 785408
      %18 = vst.msk [vmem:[#allocation2] sm:$0xff] %vm17, 0.0
      %19 = vst.msk [vmem:[#allocation2 + $0x8] sm:$0xff] %vm17, 0.0
    $region13: #{transformer_forward.31} parent=1 // pred_fallthru
      _
    %v20 = vld [vmem:[#allocation2] sm:$0xff]
    %v21 = vld [vmem:[#allocation2 + $0x8] sm:$0xff]
    %v22 = vld [vmem:[%s0] sm:$0xf]
    %v23 = vld [vmem:[%s0 + $0x4] sm:$0xf]
    %v24 = vld [vmem:[%s1] sm:$0xf]
    %v25 = vld [vmem:[%s1 + $0x4] sm:$0xf]
    %v26 = vld [vmem:[%s1 + $0x8] sm:$0xf]
    %v27 = vld [vmem:[%s1 + $0xc] sm:$0xf]
    %v28 = vld [vmem:[%s1 + $0x10] sm:$0xf]
    %v29 = vld [vmem:[%s1 + $0x14] sm:$0xf]
    %v30 = vld [vmem:[%s1 + $0x18] sm:$0xf]
    %v31 = vld [vmem:[%s1 + $0x1c] sm:$0xf]
    %v34 = vunpack.c.l.b16 %v22
    %v35 = vunpack.c.l.b16 %v23
    %v36 = vpack.c.b16 %v35, %v34
    %v45 = vunpack.c.l.b16 %v24
    %v46 = vunpack.c.l.b16 %v25
    %v47 = vunpack.c.l.b16 %v26
    %v48 = vunpack.c.l.b16 %v27
    %v49 = vunpack.c.l.b16 %v28
    %v50 = vunpack.c.l.b16 %v29
    %v51 = vunpack.c.l.b16 %v30
    %v52 = vunpack.c.l.b16 %v31
    %v53 = vpack.c.b16 %v46, %v45
    %v54 = vpack.c.b16 %v48, %v47
    %v55 = vpack.c.b16 %v50, %v49
    %v56 = vpack.c.b16 %v52, %v51
    %vm61 = vcmask 523264
    %v63 = vsel %vm61, %v36, 0
    %65 = vmatpush.bf16.msra.mxu0 0
    %66 = vmatpush.bf16.msra.mxu0 0
    %67 = vmatpush.bf16.msra.mxu0 0
    %68 = vmatpush.bf16.msra.mxu0 0
    %69 = vmatpush.bf16.msra.mxu0 %v56
    %70 = vmatpush.bf16.msra.mxu0 %v55
    %71 = vmatpush.bf16.msra.mxu0 %v54
    %72 = vmatpush.bf16.msra.mxu0 %v53
    %73 = vmatmul.bf16.gmra.mxu0 %v63
    %v74 = vpop.f32.mrf.mxu0
    %v75 = vadd.f32 0.0, %v74
    %v76 = vpop.f32.mrf.mxu0
    %v77 = vadd.f32 0.0, %v76
    %78 = vdwg.mxu0
    %v79 = vadd.f32 %v20, %v75
    %v80 = vadd.f32 %v21, %v77
    %vm81 = vcmask 785408
    %82 = vst.msk [vmem:[#allocation2] sm:$0xff] %vm81, %v79
    %83 = vst.msk [vmem:[#allocation2 + $0x8] sm:$0xff] %vm81, %v80
    // Predicated region
    $region14: #{transformer_forward.31} parent=1 // pred_check
      %p84 = pneg %p13
    $region15: #{transformer_forward.31} parent=1 // pred_check_branch
      %86 = sbr.rel (%p84) target = $region17
    $region16: #{transformer_forward.31} parent=1 // pred_region
      %v87 = vld [vmem:[#allocation2] sm:$0xff]
      %v88 = vld [vmem:[#allocation2 + $0x8] sm:$0xff]
      %89 = vst.msk [vmem:[#allocation3] sm:$0xff] %vm81, %v87
      %90 = vst.msk [vmem:[#allocation3 + $0x8] sm:$0xff] %vm81, %v88
    $region17: #{transformer_forward.31} parent=1 // pred_fallthru
      _
    // Predicated region
    $region18: #{transformer_forward.31} parent=1 // pred_check
      _
    $region19: #{transformer_forward.31} parent=1 // pred_check_branch
      %92 = sbr.rel (0) target = $region21
    $region20: #{transformer_forward.31} parent=1 // pred_region
      %94 = vsyncadd [#allocation4], 0
      %s95 = sshll.u32 [#allocation3], 4
      %s96 = int_to_ptr.vmem [resolvable:$true] %s95
      %s97 = sshll.u32 %s2, 4
      %s98 = int_to_ptr.hbm [resolvable:$true] %s97
      %103 = dma.vmem_to_hbm [thread:$0]  %s96, 256, %s98, [#allocation4], 128, 128, 8
    $region21: #{transformer_forward.31} parent=1 // pred_fallthru
      _
    // Predicated region
    $region22: #{transformer_forward.31} parent=1 // pred_check
      _
    $region23: #{transformer_forward.31} parent=1 // pred_check_branch
      %105 = sbr.rel (0) target = $region25
    $region24: #{transformer_forward.31} parent=1 // pred_region
      %107 = dma.done [#allocation4], 256
    $region25: #{transformer_forward.31} parent=1 // pred_fallthru
      _
    %108 = vsyncpa [#allocation4], 1

</llo_original>
